<compile_context>
chip_gen: v7x
topology: tpu7x:2x2x1
jax: 0.10.0
libtpu: 0.0.40
codegen_flags: <defaults>
</compile_context>

<pallas_src>
import functools

import jax
import jax.numpy as jnp
from jax.experimental import pallas as pl
from jax.experimental.pallas import tpu as pltpu

# Shapes consistent with the module defaults.
VOCAB = 64        # vocab_size
EMB = 32          # embedding_dim
HIDDEN = 512      # hidden_dim
CTX = 10          # context_length
BATCH = 8
EPS = 1e-5        # nn.LayerNorm default eps


def _round_up(x, m):
    return (x + m - 1) // m * m


def _ceildiv(a, b):
    return -(-a // b)


def _elementwise_dtype():
    """bf16 elementwise on chips with a bf16 VPU/EUP (v6e, v7x); f32 otherwise."""
    try:
        kind = jax.devices()[0].device_kind.lower()
    except Exception:  # pragma: no cover - e.g. no devices during tracing tools
        return jnp.float32
    return jnp.bfloat16 if ("v6" in kind or "7" in kind) else jnp.float32


def _ln_silu(h, g, b, ew_dtype):
    """One-pass LayerNorm (biased var, torch-faithful) + SiLU. Returns bf16."""
    n = h.shape[-1]
    inv_n = 1.0 / n
    s1 = jnp.sum(h, axis=-1, keepdims=True)
    s2 = jnp.sum(h * h, axis=-1, keepdims=True)
    mu = s1 * inv_n
    var = s2 * inv_n - mu * mu                       # biased variance, as torch
    hn = (h - mu) * jax.lax.rsqrt(var + EPS)         # f32 mean/var/rsqrt path
    hn = hn.astype(ew_dtype) * g.astype(ew_dtype) + b.astype(ew_dtype)
    return (hn * jax.nn.sigmoid(hn)).astype(jnp.bfloat16)   # bf16 feeds next MXU op


def char_mlp_kernel(x_ref, w1_ref, w2_ref, w3_ref, vec_ref, out_ref, *,
                    np_out, ew_dtype):
    # vec_ref rows: 0=b1 1=g1 2=be1 3=b2 4=g2 5=be2 6=b3 (padded to H); all f32.
    b1, g1, be1 = vec_ref[0:1, :], vec_ref[1:2, :], vec_ref[2:3, :]
    b2, g2, be2 = vec_ref[3:4, :], vec_ref[4:5, :], vec_ref[5:6, :]
    b3 = vec_ref[6:7, 0:np_out]

    # Linear1 on the gathered (bm, C*E) bf16 activations; f32 accumulation.
    h = jnp.dot(x_ref[...], w1_ref[...], preferred_element_type=jnp.float32) + b1
    h = _ln_silu(h, g1, be1, ew_dtype)

    h = jnp.dot(h, w2_ref[...], preferred_element_type=jnp.float32) + b2
    h = _ln_silu(h, g2, be2, ew_dtype)

    out_ref[...] = jnp.dot(h, w3_ref[...],
                           preferred_element_type=jnp.float32) + b3


def prepare_params(params):
    """One-time parameter preprocessing. Call once; reuse the result per forward."""
    emb, w1, b1, g1, be1, w2, b2, g2, be2, w3, b3 = params
    V, E = emb.shape
    Kin, H = w1.shape
    N = w3.shape[1]
    NP = _round_up(N, 128)                   # lane-dense padded output features
    assert NP <= H, "b3 is packed into the (7, H) vector block"

    emb_b = emb.astype(jnp.bfloat16)                          # gathered per call
    w1b = w1.astype(jnp.bfloat16)                             # (C*E, H)
    w2b = w2.astype(jnp.bfloat16)                             # (H, H)
    w3b = jnp.pad(w3, ((0, 0), (0, NP - N))).astype(jnp.bfloat16)   # (H, NP)
    b3p = jnp.pad(b3.reshape(1, N), ((0, 0), (0, H - N)))
    vecs = jnp.concatenate(
        [b1.reshape(1, H), g1.reshape(1, H), be1.reshape(1, H),
         b2.reshape(1, H), g2.reshape(1, H), be2.reshape(1, H), b3p],
        axis=0).astype(jnp.float32)                           # (7, H)
    dims = (V, E, H, NP)
    return emb_b, w1b, w2b, w3b, vecs, dims


def _pick_tile(B, block_b):
    Bp = _round_up(B, 16)                        # bf16 packs 16 rows per vreg
    bm = min(_round_up(block_b, 16), Bp)
    # Guarantee >= 2 "parallel" grid steps when there is enough work so v7x's
    # two TensorCores both get a batch slice.
    if Bp >= 32 and _ceildiv(Bp, bm) < 2:
        bm = _round_up(_ceildiv(Bp, 2), 16)
    Bp = _round_up(Bp, bm)
    return bm, Bp


def char_mlp(idx, prepared, *, block_b=512):
    """Forward pass. idx: (B, CTX) int32. Returns (B, VOCAB) f32."""
    emb_b, w1b, w2b, w3b, vecs, dims = prepared
    V, E, H, NP = dims
    B, C = idx.shape
    K = C * E

    # Per-call work: tiny bf16 embedding gather + optional batch pad only.
    x = emb_b[idx].reshape(B, K)                          # (B, C*E) bf16
    bm, Bp = _pick_tile(B, block_b)
    if Bp != B:
        x = jnp.pad(x, ((0, Bp - B), (0, 0)))
    grid = (Bp // bm,)

    kernel = functools.partial(char_mlp_kernel, np_out=NP,
                               ew_dtype=_elementwise_dtype())

    out = pl.pallas_call(
        kernel,
        out_shape=jax.ShapeDtypeStruct((Bp, NP), jnp.float32),
        grid=grid,
        in_specs=[
            pl.BlockSpec((bm, K), lambda i: (i, 0)),     # activations: batch-tiled
            pl.BlockSpec((K, H), lambda i: (0, 0)),      # W1 (VMEM-resident)
            pl.BlockSpec((H, H), lambda i: (0, 0)),      # W2 (VMEM-resident)
            pl.BlockSpec((H, NP), lambda i: (0, 0)),     # W3 padded (resident)
            pl.BlockSpec((7, H), lambda i: (0, 0)),      # packed b/gamma/beta/b3
        ],
        out_specs=pl.BlockSpec((bm, NP), lambda i: (i, 0)),
        compiler_params=pltpu.CompilerParams(
            dimension_semantics=("parallel",)),
    )(x, w1b, w2b, w3b, vecs)

    return out[:B, :V]


def init_params(key):
    ks = jax.random.split(key, 5)
    s = 0.02
    emb = s * jax.random.normal(ks[0], (VOCAB, EMB), jnp.float32)
    # Linear weights stored as (in, out); equivalent to torch's (out, in).T.
    w1 = s * jax.random.normal(ks[1], (CTX * EMB, HIDDEN), jnp.float32)
    b1 = jnp.zeros((1, HIDDEN), jnp.float32)
    g1 = jnp.ones((1, HIDDEN), jnp.float32)
    be1 = jnp.zeros((1, HIDDEN), jnp.float32)
    w2 = s * jax.random.normal(ks[2], (HIDDEN, HIDDEN), jnp.float32)
    b2 = jnp.zeros((1, HIDDEN), jnp.float32)
    g2 = jnp.ones((1, HIDDEN), jnp.float32)
    be2 = jnp.zeros((1, HIDDEN), jnp.float32)
    w3 = s * jax.random.normal(ks[3], (HIDDEN, VOCAB), jnp.float32)
    b3 = jnp.zeros((1, VOCAB), jnp.float32)
    return (emb, w1, b1, g1, be1, w2, b2, g2, be2, w3, b3)


def reference(idx, params):
    # Pure-f32, PyTorch-faithful reference (embedding gather + Sequential MLP).
    emb, w1, b1, g1, be1, w2, b2, g2, be2, w3, b3 = params

    def ln(h, g, b):
        mu = jnp.mean(h, axis=-1, keepdims=True)
        var = jnp.mean((h - mu) ** 2, axis=-1, keepdims=True)
        return (h - mu) * jax.lax.rsqrt(var + EPS) * g + b

    def silu(h):
        return h * jax.nn.sigmoid(h)

    x = emb[idx].reshape(idx.shape[0], -1)
    h = silu(ln(x @ w1 + b1, g1, be1))
    h = silu(ln(h @ w2 + b2, g2, be2))
    return h @ w3 + b3


if __name__ == "__main__":
    key = jax.random.PRNGKey(0)
    k_idx, k_par = jax.random.split(key)
    idx = jax.random.randint(k_idx, (BATCH, CTX), 0, VOCAB, dtype=jnp.int32)
    params = init_params(k_par)

    prepared = prepare_params(params)        # one-time; reused across calls
    out = jax.block_until_ready(char_mlp(idx, prepared))
    ref = reference(idx, params)

    assert out.shape == (BATCH, VOCAB)
    # Matmuls use bf16 operands (f32 accumulation) and, on v6e/v7x, bf16
    # LayerNorm-tail/SiLU — compare to the f32 reference at bf16-level tolerance.
    assert jnp.allclose(out, ref, atol=5e-2, rtol=5e-2), \
        float(jnp.max(jnp.abs(out - ref)))
    print("KERNEL_OK")
</pallas_src>

<mosaic_0001>
module attributes {stable_mosaic.version = 11 : i64} {
  func.func @char_mlp_kernel(%arg0: i32, %arg1: memref<16x320xbf16, #tpu.memory_space<vmem>>, %arg2: memref<320x512xbf16, #tpu.memory_space<vmem>>, %arg3: memref<512x512xbf16, #tpu.memory_space<vmem>>, %arg4: memref<512x128xbf16, #tpu.memory_space<vmem>>, %arg5: memref<7x512xf32, #tpu.memory_space<vmem>>, %arg6: memref<16x128xf32, #tpu.memory_space<vmem>>) attributes {dimension_semantics = [#tpu.dimension_semantics<parallel>], iteration_bounds = array<i64: 1>, scalar_prefetch = 0 : i64, scratch_operands = 0 : i64, tpu.core_type = #tpu.core_type<tc>, window_params = [{transform_indices = @transform_0, window_bounds = array<i64: 16, 320>}, {pipeline_mode = #tpu.pipeline_mode<synchronous>, transform_indices = @transform_1, window_bounds = array<i64: 320, 512>}, {pipeline_mode = #tpu.pipeline_mode<synchronous>, transform_indices = @transform_2, window_bounds = array<i64: 512, 512>}, {pipeline_mode = #tpu.pipeline_mode<synchronous>, transform_indices = @transform_3, window_bounds = array<i64: 512, 128>}, {pipeline_mode = #tpu.pipeline_mode<synchronous>, transform_indices = @transform_4, window_bounds = array<i64: 7, 512>}, {transform_indices = @transform_5, window_bounds = array<i64: 16, 128>}]} {
    %c0 = arith.constant 0 : index
    %c0_0 = arith.constant 0 : index
    %0 = vector.load %arg5[%c0, %c0_0] : memref<7x512xf32, #tpu.memory_space<vmem>>, vector<1x512xf32>
    %c1 = arith.constant 1 : index
    %c0_1 = arith.constant 0 : index
    %1 = vector.load %arg5[%c1, %c0_1] : memref<7x512xf32, #tpu.memory_space<vmem>>, vector<1x512xf32>
    %c2 = arith.constant 2 : index
    %c0_2 = arith.constant 0 : index
    %2 = vector.load %arg5[%c2, %c0_2] : memref<7x512xf32, #tpu.memory_space<vmem>>, vector<1x512xf32>
    %c3 = arith.constant 3 : index
    %c0_3 = arith.constant 0 : index
    %3 = vector.load %arg5[%c3, %c0_3] : memref<7x512xf32, #tpu.memory_space<vmem>>, vector<1x512xf32>
    %c4 = arith.constant 4 : index
    %c0_4 = arith.constant 0 : index
    %4 = vector.load %arg5[%c4, %c0_4] : memref<7x512xf32, #tpu.memory_space<vmem>>, vector<1x512xf32>
    %c5 = arith.constant 5 : index
    %c0_5 = arith.constant 0 : index
    %5 = vector.load %arg5[%c5, %c0_5] : memref<7x512xf32, #tpu.memory_space<vmem>>, vector<1x512xf32>
    %c6 = arith.constant 6 : index
    %c0_6 = arith.constant 0 : index
    %6 = vector.load %arg5[%c6, %c0_6] : memref<7x512xf32, #tpu.memory_space<vmem>>, vector<1x128xf32>
    %c0_7 = arith.constant 0 : index
    %c0_8 = arith.constant 0 : index
    %7 = vector.load %arg1[%c0_7, %c0_8] : memref<16x320xbf16, #tpu.memory_space<vmem>>, vector<16x320xbf16>
    %c0_9 = arith.constant 0 : index
    %c0_10 = arith.constant 0 : index
    %8 = vector.load %arg2[%c0_9, %c0_10] : memref<320x512xbf16, #tpu.memory_space<vmem>>, vector<320x512xbf16>
    %cst = arith.constant dense<0.000000e+00> : vector<16x512xf32>
    %9 = tpu.matmul %7, %8, %cst {dimension_numbers = #tpu.dot_dimension_numbers<[1], [0], [0], [1], [0, 0, 1, 1], [], []>} : vector<16x320xbf16>, vector<320x512xbf16>, vector<16x512xf32> -> vector<16x512xf32>
    %10 = vector.broadcast %0 : vector<1x512xf32> to vector<16x512xf32>
    %11 = arith.addf %9, %10 : vector<16x512xf32>
    %cst_11 = arith.constant dense<0.000000e+00> : vector<16xf32>
    %12 = vector.multi_reduction <add>, %11, %cst_11 [1] : vector<16x512xf32> to vector<16xf32>
    %13 = vector.shape_cast %12 : vector<16xf32> to vector<16x1xf32>
    %14 = arith.mulf %11, %11 : vector<16x512xf32>
    %cst_12 = arith.constant dense<0.000000e+00> : vector<16xf32>
    %15 = vector.multi_reduction <add>, %14, %cst_12 [1] : vector<16x512xf32> to vector<16xf32>
    %16 = vector.shape_cast %15 : vector<16xf32> to vector<16x1xf32>
    %cst_13 = arith.constant 0.001953125 : f32
    %17 = vector.broadcast %cst_13 : f32 to vector<16x1xf32>
    %18 = arith.mulf %13, %17 : vector<16x1xf32>
    %cst_14 = arith.constant 0.001953125 : f32
    %19 = vector.broadcast %cst_14 : f32 to vector<16x1xf32>
    %20 = arith.mulf %16, %19 : vector<16x1xf32>
    %21 = arith.mulf %18, %18 : vector<16x1xf32>
    %22 = arith.subf %20, %21 : vector<16x1xf32>
    %23 = vector.broadcast %18 : vector<16x1xf32> to vector<16x512xf32>
    %24 = arith.subf %11, %23 : vector<16x512xf32>
    %cst_15 = arith.constant 9.99999974E-6 : f32
    %25 = vector.broadcast %cst_15 : f32 to vector<16x1xf32>
    %26 = arith.addf %22, %25 : vector<16x1xf32>
    %27 = math.rsqrt %26 : vector<16x1xf32>
    %28 = vector.broadcast %27 : vector<16x1xf32> to vector<16x512xf32>
    %29 = arith.mulf %24, %28 : vector<16x512xf32>
    %30 = vector.broadcast %1 : vector<1x512xf32> to vector<16x512xf32>
    %31 = arith.mulf %29, %30 : vector<16x512xf32>
    %32 = vector.broadcast %2 : vector<1x512xf32> to vector<16x512xf32>
    %33 = arith.addf %31, %32 : vector<16x512xf32>
    %34 = arith.negf %33 : vector<16x512xf32>
    %35 = math.exp %34 : vector<16x512xf32>
    %cst_16 = arith.constant 1.000000e+00 : f32
    %36 = vector.broadcast %cst_16 : f32 to vector<16x512xf32>
    %37 = arith.addf %36, %35 : vector<16x512xf32>
    %38 = arith.divf %36, %37 : vector<16x512xf32>
    %39 = arith.mulf %33, %38 : vector<16x512xf32>
    %40 = arith.truncf %39 : vector<16x512xf32> to vector<16x512xbf16>
    %c0_17 = arith.constant 0 : index
    %c0_18 = arith.constant 0 : index
    %41 = vector.load %arg3[%c0_17, %c0_18] : memref<512x512xbf16, #tpu.memory_space<vmem>>, vector<512x512xbf16>
    %cst_19 = arith.constant dense<0.000000e+00> : vector<16x512xf32>
    %42 = tpu.matmul %40, %41, %cst_19 {dimension_numbers = #tpu.dot_dimension_numbers<[1], [0], [0], [1], [0, 0, 1, 1], [], []>} : vector<16x512xbf16>, vector<512x512xbf16>, vector<16x512xf32> -> vector<16x512xf32>
    %43 = vector.broadcast %3 : vector<1x512xf32> to vector<16x512xf32>
    %44 = arith.addf %42, %43 : vector<16x512xf32>
    %cst_20 = arith.constant dense<0.000000e+00> : vector<16xf32>
    %45 = vector.multi_reduction <add>, %44, %cst_20 [1] : vector<16x512xf32> to vector<16xf32>
    %46 = vector.shape_cast %45 : vector<16xf32> to vector<16x1xf32>
    %47 = arith.mulf %44, %44 : vector<16x512xf32>
    %cst_21 = arith.constant dense<0.000000e+00> : vector<16xf32>
    %48 = vector.multi_reduction <add>, %47, %cst_21 [1] : vector<16x512xf32> to vector<16xf32>
    %49 = vector.shape_cast %48 : vector<16xf32> to vector<16x1xf32>
    %cst_22 = arith.constant 0.001953125 : f32
    %50 = vector.broadcast %cst_22 : f32 to vector<16x1xf32>
    %51 = arith.mulf %46, %50 : vector<16x1xf32>
    %cst_23 = arith.constant 0.001953125 : f32
    %52 = vector.broadcast %cst_23 : f32 to vector<16x1xf32>
    %53 = arith.mulf %49, %52 : vector<16x1xf32>
    %54 = arith.mulf %51, %51 : vector<16x1xf32>
    %55 = arith.subf %53, %54 : vector<16x1xf32>
    %56 = vector.broadcast %51 : vector<16x1xf32> to vector<16x512xf32>
    %57 = arith.subf %44, %56 : vector<16x512xf32>
    %cst_24 = arith.constant 9.99999974E-6 : f32
    %58 = vector.broadcast %cst_24 : f32 to vector<16x1xf32>
    %59 = arith.addf %55, %58 : vector<16x1xf32>
    %60 = math.rsqrt %59 : vector<16x1xf32>
    %61 = vector.broadcast %60 : vector<16x1xf32> to vector<16x512xf32>
    %62 = arith.mulf %57, %61 : vector<16x512xf32>
    %63 = vector.broadcast %4 : vector<1x512xf32> to vector<16x512xf32>
    %64 = arith.mulf %62, %63 : vector<16x512xf32>
    %65 = vector.broadcast %5 : vector<1x512xf32> to vector<16x512xf32>
    %66 = arith.addf %64, %65 : vector<16x512xf32>
    %67 = arith.negf %66 : vector<16x512xf32>
    %68 = math.exp %67 : vector<16x512xf32>
    %cst_25 = arith.constant 1.000000e+00 : f32
    %69 = vector.broadcast %cst_25 : f32 to vector<16x512xf32>
    %70 = arith.addf %69, %68 : vector<16x512xf32>
    %71 = arith.divf %69, %70 : vector<16x512xf32>
    %72 = arith.mulf %66, %71 : vector<16x512xf32>
    %73 = arith.truncf %72 : vector<16x512xf32> to vector<16x512xbf16>
    %c0_26 = arith.constant 0 : index
    %c0_27 = arith.constant 0 : index
    %74 = vector.load %arg4[%c0_26, %c0_27] : memref<512x128xbf16, #tpu.memory_space<vmem>>, vector<512x128xbf16>
    %cst_28 = arith.constant dense<0.000000e+00> : vector<16x128xf32>
    %75 = tpu.matmul %73, %74, %cst_28 {dimension_numbers = #tpu.dot_dimension_numbers<[1], [0], [0], [1], [0, 0, 1, 1], [], []>} : vector<16x512xbf16>, vector<512x128xbf16>, vector<16x128xf32> -> vector<16x128xf32>
    %76 = vector.broadcast %6 : vector<1x128xf32> to vector<16x128xf32>
    %77 = arith.addf %75, %76 : vector<16x128xf32>
    %c0_29 = arith.constant 0 : index
    %c0_30 = arith.constant 0 : index
    %78 = vector.load %arg6[%c0_29, %c0_30] : memref<16x128xf32, #tpu.memory_space<vmem>>, vector<16x128xf32>
    tpu.vector_store %arg6[%c0_29, %c0_30], %77 {strides = array<i32>} : memref<16x128xf32, #tpu.memory_space<vmem>>, vector<16x128xf32>,
    return
  }
  func.func @transform_0(%arg0: i32) -> (i32, i32) {
    %c0_i32 = arith.constant 0 : i32
    %c0_i32_0 = arith.constant 0 : i32
    return %arg0, %c0_i32 : i32, i32
  }
  func.func @transform_1(%arg0: i32) -> (i32, i32) {
    %c0_i32 = arith.constant 0 : i32
    %c0_i32_0 = arith.constant 0 : i32
    %c0_i32_1 = arith.constant 0 : i32
    return %c0_i32, %c0_i32_0 : i32, i32
  }
  func.func @transform_2(%arg0: i32) -> (i32, i32) {
    %c0_i32 = arith.constant 0 : i32
    %c0_i32_0 = arith.constant 0 : i32
    %c0_i32_1 = arith.constant 0 : i32
    return %c0_i32, %c0_i32_0 : i32, i32
  }
  func.func @transform_3(%arg0: i32) -> (i32, i32) {
    %c0_i32 = arith.constant 0 : i32
    %c0_i32_0 = arith.constant 0 : i32
    %c0_i32_1 = arith.constant 0 : i32
    return %c0_i32, %c0_i32_0 : i32, i32
  }
  func.func @transform_4(%arg0: i32) -> (i32, i32) {
    %c0_i32 = arith.constant 0 : i32
    %c0_i32_0 = arith.constant 0 : i32
    %c0_i32_1 = arith.constant 0 : i32
    return %c0_i32, %c0_i32_0 : i32, i32
  }
  func.func @transform_5(%arg0: i32) -> (i32, i32) {
    %c0_i32 = arith.constant 0 : i32
    %c0_i32_0 = arith.constant 0 : i32
    return %arg0, %c0_i32 : i32, i32
  }
}

</mosaic_0001>

<llo_original>
// kernel: tpu_custom_call.1
$region0: #{tpu_custom_call.1}
  #allocation0 [shape = 'u32[]', space=smem, size = 0x4, offset = 0x4, fixed_abs, tag = 'smem constant byte address 0x4 - core index']
  #allocation1 [shape = 'u32[144,128]{1,0:T(1,128)}', space=vmem, size = 0x12000, scoped, tag = 'internal scratch']
  %s0 = inlined_call_operand.hbm [shape: bf16[16,320], index: 0, kind: input, shape index: {}]
  %s1 = inlined_call_operand.hbm [shape: bf16[320,512], index: 1, kind: input, shape index: {}]
  %s2 = inlined_call_operand.hbm [shape: bf16[512,512], index: 2, kind: input, shape index: {}]
  %s3 = inlined_call_operand.hbm [shape: bf16[512,128], index: 3, kind: input, shape index: {}]
  %s4 = inlined_call_operand.hbm [shape: f32[7,512], index: 4, kind: input, shape index: {}]
  %s5 = inlined_call_operand.hbm [shape: f32[16,128], index: 5, kind: output, shape index: {}]
  %s6 = sld [smem:[#allocation0]]
  $region50: #{tpu_custom_call.1} parent=0
    _
  %s8 = ssub.s32 1, %s6
  %s9 = scalar_select 0, %s8, %s6
  $region1: #{tpu_custom_call.1} parent=0
    #allocation2 [shape = 'u8[12288]{0}', space=vmem, size = 0x3000, scoped, tag = 'input window, operand 0, single buffered']
    #allocation3 [shape = 's32[1]{0}', space=sflag, size = 0x4, scoped, tag = 'scoped memory for tpu_custom_call.1']
    #allocation4 [shape = 's32[1]{0}', space=sflag, size = 0x4, scoped, tag = 'scoped memory for tpu_custom_call.1']
    #allocation5 [shape = 'u8[327680]{0}', space=vmem, size = 0x50000, scoped, tag = 'input window, operand 1, single buffered']
    #allocation6 [shape = 's32[1]{0}', space=sflag, size = 0x4, scoped, tag = 'scoped memory for tpu_custom_call.1']
    #allocation7 [shape = 'u8[524288]{0}', space=vmem, size = 0x80000, scoped, tag = 'input window, operand 2, single buffered']
    #allocation8 [shape = 'u8[131072]{0}', space=vmem, size = 0x20000, scoped, tag = 'input window, operand 3, single buffered']
    #allocation9 [shape = 's32[1]{0}', space=sflag, size = 0x4, scoped, tag = 'scoped memory for tpu_custom_call.1']
    #allocation10 [shape = 'u8[16384]{0}', space=vmem, size = 0x4000, scoped, tag = 'input window, operand 4, single buffered']
    #allocation11 [shape = 'u8[8192]{0}', space=vmem, size = 0x2000, scoped, tag = 'output window, operand 0, single buffered']
    %10 = vsyncpa [#allocation3], 0
    %11 = vsyncpa [#allocation6], 0
    %12 = vsyncpa [#allocation9], 0
    %13 = vsyncpa [#allocation4], 0
    // Predicated region
    $region2: #{tpu_custom_call.1} parent=1 // pred_check
      _
    $region3: #{tpu_custom_call.1} parent=1 // pred_check_branch
      %15 = sbr.rel (0) target = $region5
    $region4: #{tpu_custom_call.1} parent=1 // pred_region
      %s17 = ssub.s32 384, 384
      %18 = vsyncadd [#allocation3], %s17
      %s19 = sshll.u32 [#allocation2], 4
      %s20 = int_to_ptr.vmem [resolvable:$true] %s19
      %25 = dma.hbm_to_vmem [thread:$0]  %s0, 384, %s20, [#allocation3], 192, 192, 12
    $region5: #{tpu_custom_call.1} parent=1 // pred_fallthru
      _
    // Predicated region
    $region6: #{tpu_custom_call.1} parent=1 // pred_check
      _
    $region7: #{tpu_custom_call.1} parent=1 // pred_check_branch
      %27 = sbr.rel (0) target = $region9
    $region8: #{tpu_custom_call.1} parent=1 // pred_region
      %s29 = ssub.s32 10240, 10240
      %30 = vsyncadd [#allocation6], %s29
      %s31 = sshll.u32 [#allocation5], 4
      %s32 = int_to_ptr.vmem [resolvable:$true] %s31
      %37 = dma.hbm_to_vmem [thread:$0]  %s1, 10240, %s32, [#allocation6], 256, 256, 16
    $region9: #{tpu_custom_call.1} parent=1 // pred_fallthru
      _
    // Predicated region
    $region10: #{tpu_custom_call.1} parent=1 // pred_check
      _
    $region11: #{tpu_custom_call.1} parent=1 // pred_check_branch
      %39 = sbr.rel (0) target = $region13
    $region12: #{tpu_custom_call.1} parent=1 // pred_region
      %s41 = ssub.s32 16384, 16384
      %42 = vsyncadd [#allocation6], %s41
      %s43 = sshll.u32 [#allocation7], 4
      %s44 = int_to_ptr.vmem [resolvable:$true] %s43
      %49 = dma.hbm_to_vmem [thread:$0]  %s2, 16384, %s44, [#allocation6], 256, 256, 16
    $region13: #{tpu_custom_call.1} parent=1 // pred_fallthru
      _
    // Predicated region
    $region14: #{tpu_custom_call.1} parent=1 // pred_check
      _
    $region15: #{tpu_custom_call.1} parent=1 // pred_check_branch
      %51 = sbr.rel (0) target = $region17
    $region16: #{tpu_custom_call.1} parent=1 // pred_region
      %s53 = ssub.s32 4096, 4096
      %54 = vsyncadd [#allocation9], %s53
      %s55 = sshll.u32 [#allocation8], 4
      %s56 = int_to_ptr.vmem [resolvable:$true] %s55
      %61 = dma.hbm_to_vmem [thread:$0]  %s3, 4096, %s56, [#allocation9], 64, 64, 4
    $region17: #{tpu_custom_call.1} parent=1 // pred_fallthru
      _
    // Predicated region
    $region18: #{tpu_custom_call.1} parent=1 // pred_check
      _
    $region19: #{tpu_custom_call.1} parent=1 // pred_check_branch
      %63 = sbr.rel (0) target = $region21
    $region20: #{tpu_custom_call.1} parent=1 // pred_region
      %s65 = ssub.s32 512, 512
      %66 = vsyncadd [#allocation9], %s65
      %s68 = sshll.u32 [#allocation10], 4
      %s69 = int_to_ptr.vmem [resolvable:$true] %s68
      %71 = dma.hbm_to_vmem [thread:$0]  %s4, 512, %s69, [#allocation9]
    $region21: #{tpu_custom_call.1} parent=1 // pred_fallthru
      _
    // Predicated region
    $region22: #{tpu_custom_call.1} parent=1 // pred_check
      _
    $region23: #{tpu_custom_call.1} parent=1 // pred_check_branch
      %73 = sbr.rel (0) target = $region25
    $region24: #{tpu_custom_call.1} parent=1 // pred_region
      %74 = dma.done [#allocation3], 384
    $region25: #{tpu_custom_call.1} parent=1 // pred_fallthru
      _
    // Predicated region
    $region26: #{tpu_custom_call.1} parent=1 // pred_check
      _
    $region27: #{tpu_custom_call.1} parent=1 // pred_check_branch
      %76 = sbr.rel (0) target = $region29
    $region28: #{tpu_custom_call.1} parent=1 // pred_region
      %77 = dma.done [#allocation6], 10240
    $region29: #{tpu_custom_call.1} parent=1 // pred_fallthru
      _
    // Predicated region
    $region30: #{tpu_custom_call.1} parent=1 // pred_check
      _
    $region31: #{tpu_custom_call.1} parent=1 // pred_check_branch
      %79 = sbr.rel (0) target = $region33
    $region32: #{tpu_custom_call.1} parent=1 // pred_region
      %80 = dma.done [#allocation6], 16384
    $region33: #{tpu_custom_call.1} parent=1 // pred_fallthru
      _
    // Predicated region
    $region34: #{tpu_custom_call.1} parent=1 // pred_check
      _
    $region35: #{tpu_custom_call.1} parent=1 // pred_check_branch
      %82 = sbr.rel (0) target = $region37
    $region36: #{tpu_custom_call.1} parent=1 // pred_region
      %83 = dma.done [#allocation9], 4096
    $region37: #{tpu_custom_call.1} parent=1 // pred_fallthru
      _
    // Predicated region
    $region38: #{tpu_custom_call.1} parent=1 // pred_check
      _
    $region39: #{tpu_custom_call.1} parent=1 // pred_check_branch
      %85 = sbr.rel (0) target = $region41
    $region40: #{tpu_custom_call.1} parent=1 // pred_region
      %86 = dma.done [#allocation9], 512
    $region41: #{tpu_custom_call.1} parent=1 // pred_fallthru
      _
    %v88 = vld [vmem:[#allocation10] ss:$8 sm:$0xf]
    %s89 = scalar_lea.vmem [#allocation10], 1
    %v90 = vld [vmem:[%s89] ss:$8 sm:$0xf]
    %s91 = scalar_lea.vmem [#allocation10], 2
    %v92 = vld [vmem:[%s91] ss:$8 sm:$0xf]
    %s93 = scalar_lea.vmem [#allocation10], 3
    %v94 = vld [vmem:[%s93] ss:$8 sm:$0xf]
    %s95 = scalar_lea.vmem [#allocation10], 4
    %v96 = vld [vmem:[%s95] ss:$8 sm:$0xf]
    %s97 = scalar_lea.vmem [#allocation10], 5
    %v98 = vld [vmem:[%s97] ss:$8 sm:$0xf]
    %v99 = vld [vmem:[#allocation10 + $0x6] ss:$0 sm:$0xff]
    %v100 = vld [vmem:[#allocation2] sm:$0xff]
    %v101 = vld [vmem:[#allocation2 + $0x8] sm:$0xf]
    %v102 = vld [vmem:[#allocation2 + $0xc] sm:$0xff]
    %v103 = vld [vmem:[#allocation2 + $0x14] sm:$0xf]
    %v104 = vld [vmem:[#allocation5] sm:$0xff]
    %v105 = vld [vmem:[#allocation5 + $0x8] sm:$0xff]
    %v106 = vld [vmem:[#allocation5 + $0x10] sm:$0xff]
    %v107 = vld [vmem:[#allocation5 + $0x18] sm:$0xff]
    %v108 = vld [vmem:[#allocation5 + $0x20] sm:$0xff]
    %v109 = vld [vmem:[#allocation5 + $0x28] sm:$0xff]
    %v110 = vld [vmem:[#allocation5 + $0x30] sm:$0xff]
    %v111 = vld [vmem:[#allocation5 + $0x38] sm:$0xff]
    %v112 = vld [vmem:[#allocation5 + $0x40] sm:$0xff]
    %v113 = vld [vmem:[#allocation5 + $0x48] sm:$0xff]
    %v114 = vld [vmem:[#allocation5 + $0x50] sm:$0xff]
    %v115 = vld [vmem:[#allocation5 + $0x58] sm:$0xff]
    %v116 = vld [vmem:[#allocation5 + $0x60] sm:$0xff]
    %v117 = vld [vmem:[#allocation5 + $0x68] sm:$0xff]
    %v118 = vld [vmem:[#allocation5 + $0x70] sm:$0xff]
    %v119 = vld [vmem:[#allocation5 + $0x78] sm:$0xff]
    %v120 = vld [vmem:[#allocation5 + $0x80] sm:$0xff]
    %v121 = vld [vmem:[#allocation5 + $0x88] sm:$0xff]
    %v122 = vld [vmem:[#allocation5 + $0x90] sm:$0xff]
    %v123 = vld [vmem:[#allocation5 + $0x98] sm:$0xff]
    %v124 = vld [vmem:[#allocation5 + $0xa0] sm:$0xff]
    %v125 = vld [vmem:[#allocation5 + $0xa8] sm:$0xff]
    %v126 = vld [vmem:[#allocation5 + $0xb0] sm:$0xff]
    %v127 = vld [vmem:[#allocation5 + $0xb8] sm:$0xff]
    %v128 = vld [vmem:[#allocation5 + $0xc0] sm:$0xff]
    %v129 = vld [vmem:[#allocation5 + $0xc8] sm:$0xff]
    %v130 = vld [vmem:[#allocation5 + $0xd0] sm:$0xff]
    %v131 = vld [vmem:[#allocation5 + $0xd8] sm:$0xff]
    %v132 = vld [vmem:[#allocation5 + $0xe0] sm:$0xff]
    %v133 = vld [vmem:[#allocation5 + $0xe8] sm:$0xff]
    %v134 = vld [vmem:[#allocation5 + $0xf0] sm:$0xff]
    %v135 = vld [vmem:[#allocation5 + $0xf8] sm:$0xff]
    %v136 = vld [vmem:[#allocation5 + $0x100] sm:$0xff]
    %v137 = vld [vmem:[#allocation5 + $0x108] sm:$0xff]
    %v138 = vld [vmem:[#allocation5 + $0x110] sm:$0xff]
    %v139 = vld [vmem:[#allocation5 + $0x118] sm:$0xff]
    %v140 = vld [vmem:[#allocation5 + $0x120] sm:$0xff]
    %v141 = vld [vmem:[#allocation5 + $0x128] sm:$0xff]
    %v142 = vld [vmem:[#allocation5 + $0x130] sm:$0xff]
    %v143 = vld [vmem:[#allocation5 + $0x138] sm:$0xff]
    %v144 = vld [vmem:[#allocation5 + $0x140] sm:$0xff]
    %v145 = vld [vmem:[#allocation5 + $0x148] sm:$0xff]
    %v146 = vld [vmem:[#allocation5 + $0x150] sm:$0xff]
    %v147 = vld [vmem:[#allocation5 + $0x158] sm:$0xff]
    %v148 = vld [vmem:[#allocation5 + $0x160] sm:$0xff]
    %v149 = vld [vmem:[#allocation5 + $0x168] sm:$0xff]
    %v150 = vld [vmem:[#allocation5 + $0x170] sm:$0xff]
    %v151 = vld [vmem:[#allocation5 + $0x178] sm:$0xff]
    %v152 = vld [vmem:[#allocation5 + $0x180] sm:$0xff]
    %v153 = vld [vmem:[#allocation5 + $0x188] sm:$0xff]
    %v154 = vld [vmem:[#allocation5 + $0x190] sm:$0xff]
    %v155 = vld [vmem:[#allocation5 + $0x198] sm:$0xff]
    %v156 = vld [vmem:[#allocation5 + $0x1a0] sm:$0xff]
    %v157 = vld [vmem:[#allocation5 + $0x1a8] sm:$0xff]
    %v158 = vld [vmem:[#allocation5 + $0x1b0] sm:$0xff]
    %v159 = vld [vmem:[#allocation5 + $0x1b8] sm:$0xff]
    %v160 = vld [vmem:[#allocation5 + $0x1c0] sm:$0xff]
    %v161 = vld [vmem:[#allocation5 + $0x1c8] sm:$0xff]
    %v162 = vld [vmem:[#allocation5 + $0x1d0] sm:$0xff]
    %v163 = vld [vmem:[#allocation5 + $0x1d8] sm:$0xff]
    %v164 = vld [vmem:[#allocation5 + $0x1e0] sm:$0xff]
    %v165 = vld [vmem:[#allocation5 + $0x1e8] sm:$0xff]
    %v166 = vld [vmem:[#allocation5 + $0x1f0] sm:$0xff]
    %v167 = vld [vmem:[#allocation5 + $0x1f8] sm:$0xff]
    %v168 = vld [vmem:[#allocation5 + $0x200] sm:$0xff]
    %v169 = vld [vmem:[#allocation5 + $0x208] sm:$0xff]
    %v170 = vld [vmem:[#allocation5 + $0x210] sm:$0xff]
    %v171 = vld [vmem:[#allocation5 + $0x218] sm:$0xff]
    %v172 = vld [vmem:[#allocation5 + $0x220] sm:$0xff]
    %v173 = vld [vmem:[#allocation5 + $0x228] sm:$0xff]
    %v174 = vld [vmem:[#allocation5 + $0x230] sm:$0xff]
    %v175 = vld [vmem:[#allocation5 + $0x238] sm:$0xff]
    %v176 = vld [vmem:[#allocation5 + $0x240] sm:$0xff]
    %v177 = vld [vmem:[#allocation5 + $0x248] sm:$0xff]
    %v178 = vld [vmem:[#allocation5 + $0x250] sm:$0xff]
    %v179 = vld [vmem:[#allocation5 + $0x258] sm:$0xff]
    %v180 = vld [vmem:[#allocation5 + $0x260] sm:$0xff]
    %v181 = vld [vmem:[#allocation5 + $0x268] sm:$0xff]
    %v182 = vld [vmem:[#allocation5 + $0x270] sm:$0xff]
    %v183 = vld [vmem:[#allocation5 + $0x278] sm:$0xff]
    %v185 = vlaneseq
    %v186 = vshrl.u32 %v185, 7
    %v187 = vsub.s32 0, %v186
    %v188 = vrot.slane %v88, %v187
    %v189 = vlaneseq
    %v190 = vshrl.u32 %v189, 7
    %v191 = vsub.s32 1, %v190
    %v192 = vrot.slane %v88, %v191
    %v193 = vlaneseq
    %v194 = vshrl.u32 %v193, 7
    %v195 = vsub.s32 2, %v194
    %v196 = vrot.slane %v88, %v195
    %v197 = vlaneseq
    %v198 = vshrl.u32 %v197, 7
    %v199 = vsub.s32 3, %v198
    %v200 = vrot.slane %v88, %v199
    %v209 = vunpack.c.l.b16 %v100
    %v210 = vunpack.c.h.b16 %v100
    %v211 = vunpack.c.l.b16 %v101
    %v212 = vunpack.c.l.b16 %v102
    %v213 = vunpack.c.h.b16 %v102
    %v214 = vunpack.c.l.b16 %v103
    %v215 = vpack.c.b16 %v212, %v209
    %v216 = vpack.c.b16 %v213, %v210
    %v217 = vpack.c.b16 %v214, %v211
    %v300 = vunpack.c.l.b16 %v104
    %v301 = vunpack.c.h.b16 %v104
    %v302 = vunpack.c.l.b16 %v105
    %v303 = vunpack.c.h.b16 %v105
    %v304 = vunpack.c.l.b16 %v106
    %v305 = vunpack.c.h.b16 %v106
    %v306 = vunpack.c.l.b16 %v107
    %v307 = vunpack.c.h.b16 %v107
    %v308 = vunpack.c.l.b16 %v108
    %v309 = vunpack.c.h.b16 %v108
    %v310 = vunpack.c.l.b16 %v109
    %v311 = vunpack.c.h.b16 %v109
    %v312 = vunpack.c.l.b16 %v110
    %v313 = vunpack.c.h.b16 %v110
    %v314 = vunpack.c.l.b16 %v111
    %v315 = vunpack.c.h.b16 %v111
    %v316 = vunpack.c.l.b16 %v112
    %v317 = vunpack.c.h.b16 %v112
    %v318 = vunpack.c.l.b16 %v113
    %v319 = vunpack.c.h.b16 %v113
    %v320 = vunpack.c.l.b16 %v114
    %v321 = vunpack.c.h.b16 %v114
    %v322 = vunpack.c.l.b16 %v115
    %v323 = vunpack.c.h.b16 %v115
    %v324 = vunpack.c.l.b16 %v116
    %v325 = vunpack.c.h.b16 %v116
    %v326 = vunpack.c.l.b16 %v117
    %v327 = vunpack.c.h.b16 %v117
    %v328 = vunpack.c.l.b16 %v118
    %v329 = vunpack.c.h.b16 %v118
    %v330 = vunpack.c.l.b16 %v119
    %v331 = vunpack.c.h.b16 %v119
    %v332 = vunpack.c.l.b16 %v120
    %v333 = vunpack.c.h.b16 %v120
    %v334 = vunpack.c.l.b16 %v121
    %v335 = vunpack.c.h.b16 %v121
    %v336 = vunpack.c.l.b16 %v122
    %v337 = vunpack.c.h.b16 %v122
    %v338 = vunpack.c.l.b16 %v123
    %v339 = vunpack.c.h.b16 %v123
    %v340 = vunpack.c.l.b16 %v124
    %v341 = vunpack.c.h.b16 %v124
    %v342 = vunpack.c.l.b16 %v125
    %v343 = vunpack.c.h.b16 %v125
    %v344 = vunpack.c.l.b16 %v126
    %v345 = vunpack.c.h.b16 %v126
    %v346 = vunpack.c.l.b16 %v127
    %v347 = vunpack.c.h.b16 %v127
    %v348 = vunpack.c.l.b16 %v128
    %v349 = vunpack.c.h.b16 %v128
    %v350 = vunpack.c.l.b16 %v129
    %v351 = vunpack.c.h.b16 %v129
    %v352 = vunpack.c.l.b16 %v130
    %v353 = vunpack.c.h.b16 %v130
    %v354 = vunpack.c.l.b16 %v131
    %v355 = vunpack.c.h.b16 %v131
    %v356 = vunpack.c.l.b16 %v132
    %v357 = vunpack.c.h.b16 %v132
    %v358 = vunpack.c.l.b16 %v133
    %v359 = vunpack.c.h.b16 %v133
    %v360 = vunpack.c.l.b16 %v134
    %v361 = vunpack.c.h.b16 %v134
    %v362 = vunpack.c.l.b16 %v135
    %v363 = vunpack.c.h.b16 %v135
    %v364 = vunpack.c.l.b16 %v136
    %v365 = vunpack.c.h.b16 %v136
    %v366 = vunpack.c.l.b16 %v137
    %v367 = vunpack.c.h.b16 %v137
    %v368 = vunpack.c.l.b16 %v138
    %v369 = vunpack.c.h.b16 %v138
    %v370 = vunpack.c.l.b16 %v139
    %v371 = vunpack.c.h.b16 %v139
    %v372 = vunpack.c.l.b16 %v140
    %v373 = vunpack.c.h.b16 %v140
    %v374 = vunpack.c.l.b16 %v141
    %v375 = vunpack.c.h.b16 %v141
    %v376 = vunpack.c.l.b16 %v142
    %v377 = vunpack.c.h.b16 %v142
    %v378 = vunpack.c.l.b16 %v143
    %v379 = vunpack.c.h.b16 %v143
    %v380 = vunpack.c.l.b16 %v144
    %v381 = vunpack.c.h.b16 %v144
    %v382 = vunpack.c.l.b16 %v145
    %v383 = vunpack.c.h.b16 %v145
    %v384 = vunpack.c.l.b16 %v146
    %v385 = vunpack.c.h.b16 %v146
    %v386 = vunpack.c.l.b16 %v147
    %v387 = vunpack.c.h.b16 %v147
    %v388 = vunpack.c.l.b16 %v148
    %v389 = vunpack.c.h.b16 %v148
    %v390 = vunpack.c.l.b16 %v149
    %v391 = vunpack.c.h.b16 %v149
    %v392 = vunpack.c.l.b16 %v150
    %v393 = vunpack.c.h.b16 %v150
    %v394 = vunpack.c.l.b16 %v151
    %v395 = vunpack.c.h.b16 %v151
    %v396 = vunpack.c.l.b16 %v152
    %v397 = vunpack.c.h.b16 %v152
    %v398 = vunpack.c.l.b16 %v153
    %v399 = vunpack.c.h.b16 %v153
    %v400 = vunpack.c.l.b16 %v154
    %v401 = vunpack.c.h.b16 %v154
    %v402 = vunpack.c.l.b16 %v155
    %v403 = vunpack.c.h.b16 %v155
    %v404 = vunpack.c.l.b16 %v156
    %v405 = vunpack.c.h.b16 %v156
    %v406 = vunpack.c.l.b16 %v157
    %v407 = vunpack.c.h.b16 %v157
    %v408 = vunpack.c.l.b16 %v158
    %v409 = vunpack.c.h.b16 %v158
    %v410 = vunpack.c.l.b16 %v159
    %v411 = vunpack.c.h.b16 %v159
    %v412 = vunpack.c.l.b16 %v160
    %v413 = vunpack.c.h.b16 %v160
    %v414 = vunpack.c.l.b16 %v161
    %v415 = vunpack.c.h.b16 %v161
    %v416 = vunpack.c.l.b16 %v162
    %v417 = vunpack.c.h.b16 %v162
    %v418 = vunpack.c.l.b16 %v163
    %v419 = vunpack.c.h.b16 %v163
    %v420 = vunpack.c.l.b16 %v164
    %v421 = vunpack.c.h.b16 %v164
    %v422 = vunpack.c.l.b16 %v165
    %v423 = vunpack.c.h.b16 %v165
    %v424 = vunpack.c.l.b16 %v166
    %v425 = vunpack.c.h.b16 %v166
    %v426 = vunpack.c.l.b16 %v167
    %v427 = vunpack.c.h.b16 %v167
    %v428 = vunpack.c.l.b16 %v168
    %v429 = vunpack.c.h.b16 %v168
    %v430 = vunpack.c.l.b16 %v169
    %v431 = vunpack.c.h.b16 %v169
    %v432 = vunpack.c.l.b16 %v170
    %v433 = vunpack.c.h.b16 %v170
    %v434 = vunpack.c.l.b16 %v171
    %v435 = vunpack.c.h.b16 %v171
    %v436 = vunpack.c.l.b16 %v172
    %v437 = vunpack.c.h.b16 %v172
    %v438 = vunpack.c.l.b16 %v173
    %v439 = vunpack.c.h.b16 %v173
    %v440 = vunpack.c.l.b16 %v174
    %v441 = vunpack.c.h.b16 %v174
    %v442 = vunpack.c.l.b16 %v175
    %v443 = vunpack.c.h.b16 %v175
    %v444 = vunpack.c.l.b16 %v176
    %v445 = vunpack.c.h.b16 %v176
    %v446 = vunpack.c.l.b16 %v177
    %v447 = vunpack.c.h.b16 %v177
    %v448 = vunpack.c.l.b16 %v178
    %v449 = vunpack.c.h.b16 %v178
    %v450 = vunpack.c.l.b16 %v179
    %v451 = vunpack.c.h.b16 %v179
    %v452 = vunpack.c.l.b16 %v180
    %v453 = vunpack.c.h.b16 %v180
    %v454 = vunpack.c.l.b16 %v181
    %v455 = vunpack.c.h.b16 %v181
    %v456 = vunpack.c.l.b16 %v182
    %v457 = vunpack.c.h.b16 %v182
    %v458 = vunpack.c.l.b16 %v183
    %v459 = vunpack.c.h.b16 %v183
    %v460 = vpack.c.b16 %v304, %v300
    %v461 = vpack.c.b16 %v305, %v301
    %v462 = vpack.c.b16 %v306, %v302
    %v463 = vpack.c.b16 %v307, %v303
    %v464 = vpack.c.b16 %v312, %v308
    %v465 = vpack.c.b16 %v313, %v309
    %v466 = vpack.c.b16 %v314, %v310
    %v467 = vpack.c.b16 %v315, %v311
    %v468 = vpack.c.b16 %v320, %v316
    %v469 = vpack.c.b16 %v321, %v317
    %v470 = vpack.c.b16 %v322, %v318
    %v471 = vpack.c.b16 %v323, %v319
    %v472 = vpack.c.b16 %v328, %v324
    %v473 = vpack.c.b16 %v329, %v325
    %v474 = vpack.c.b16 %v330, %v326
    %v475 = vpack.c.b16 %v331, %v327
    %v476 = vpack.c.b16 %v336, %v332
    %v477 = vpack.c.b16 %v337, %v333
    %v478 = vpack.c.b16 %v338, %v334
    %v479 = vpack.c.b16 %v339, %v335
    %v480 = vpack.c.b16 %v344, %v340
    %v481 = vpack.c.b16 %v345, %v341
    %v482 = vpack.c.b16 %v346, %v342
    %v483 = vpack.c.b16 %v347, %v343
    %v484 = vpack.c.b16 %v352, %v348
    %v485 = vpack.c.b16 %v353, %v349
    %v486 = vpack.c.b16 %v354, %v350
    %v487 = vpack.c.b16 %v355, %v351
    %v488 = vpack.c.b16 %v360, %v356
    %v489 = vpack.c.b16 %v361, %v357
    %v490 = vpack.c.b16 %v362, %v358
    %v491 = vpack.c.b16 %v363, %v359
    %v492 = vpack.c.b16 %v368, %v364
    %v493 = vpack.c.b16 %v369, %v365
    %v494 = vpack.c.b16 %v370, %v366
    %v495 = vpack.c.b16 %v371, %v367
    %v496 = vpack.c.b16 %v376, %v372
    %v497 = vpack.c.b16 %v377, %v373
    %v498 = vpack.c.b16 %v378, %v374
    %v499 = vpack.c.b16 %v379, %v375
    %v500 = vpack.c.b16 %v384, %v380
    %v501 = vpack.c.b16 %v385, %v381
    %v502 = vpack.c.b16 %v386, %v382
    %v503 = vpack.c.b16 %v387, %v383
    %v504 = vpack.c.b16 %v392, %v388
    %v505 = vpack.c.b16 %v393, %v389
    %v506 = vpack.c.b16 %v394, %v390
    %v507 = vpack.c.b16 %v395, %v391
    %v508 = vpack.c.b16 %v400, %v396
    %v509 = vpack.c.b16 %v401, %v397
    %v510 = vpack.c.b16 %v402, %v398
    %v511 = vpack.c.b16 %v403, %v399
    %v512 = vpack.c.b16 %v408, %v404
    %v513 = vpack.c.b16 %v409, %v405
    %v514 = vpack.c.b16 %v410, %v406
    %v515 = vpack.c.b16 %v411, %v407
    %v516 = vpack.c.b16 %v416, %v412
    %v517 = vpack.c.b16 %v417, %v413
    %v518 = vpack.c.b16 %v418, %v414
    %v519 = vpack.c.b16 %v419, %v415
    %v520 = vpack.c.b16 %v424, %v420
    %v521 = vpack.c.b16 %v425, %v421
    %v522 = vpack.c.b16 %v426, %v422
    %v523 = vpack.c.b16 %v427, %v423
    %v524 = vpack.c.b16 %v432, %v428
    %v525 = vpack.c.b16 %v433, %v429
    %v526 = vpack.c.b16 %v434, %v430
    %v527 = vpack.c.b16 %v435, %v431
    %v528 = vpack.c.b16 %v440, %v436
    %v529 = vpack.c.b16 %v441, %v437
    %v530 = vpack.c.b16 %v442, %v438
    %v531 = vpack.c.b16 %v443, %v439
    %v532 = vpack.c.b16 %v448, %v444
    %v533 = vpack.c.b16 %v449, %v445
    %v534 = vpack.c.b16 %v450, %v446
    %v535 = vpack.c.b16 %v451, %v447
    %v536 = vpack.c.b16 %v456, %v452
    %v537 = vpack.c.b16 %v457, %v453
    %v538 = vpack.c.b16 %v458, %v454
    %v539 = vpack.c.b16 %v459, %v455
    %vm620 = vcmask 523264
    %v622 = vsel %vm620, %v217, 0
    %624 = vmatprep.subr.bf16.mxu0 %v461
    %625 = vmatpush1.bf16.msra.mxu0 %v460
    %626 = vmatprep.subr.bf16.mxu0 %v465
    %627 = vmatpush1.bf16.msra.mxu0 %v464
    %628 = vmatprep.subr.bf16.mxu0 %v469
    %629 = vmatpush1.bf16.msra.mxu0 %v468
    %630 = vmatprep.subr.bf16.mxu0 %v473
    %631 = vmatpush1.bf16.msra.mxu0 %v472
    %632 = vmatprep.subr.bf16.mxu0 %v477
    %633 = vmatpush1.bf16.msra.mxu0 %v476
    %634 = vmatprep.subr.bf16.mxu0 %v481
    %635 = vmatpush1.bf16.msra.mxu0 %v480
    %636 = vmatprep.subr.bf16.mxu0 %v485
    %637 = vmatpush1.bf16.msra.mxu0 %v484
    %638 = vmatprep.subr.bf16.mxu0 %v489
    %639 = vmatpush1.bf16.msra.mxu0 %v488
    %640 = vmatprep.subr.bf16.mxu0 %v493
    %641 = vmatpush1.bf16.msra.mxu0 %v492
    %642 = vmatprep.subr.bf16.mxu0 %v497
    %643 = vmatpush1.bf16.msra.mxu0 %v496
    %644 = vmatprep.subr.bf16.mxu0 %v501
    %645 = vmatpush1.bf16.msra.mxu0 %v500
    %646 = vmatprep.subr.bf16.mxu0 %v505
    %647 = vmatpush1.bf16.msra.mxu0 %v504
    %648 = vmatprep.subr.bf16.mxu0 %v509
    %649 = vmatpush1.bf16.msra.mxu0 %v508
    %650 = vmatprep.subr.bf16.mxu0 %v513
    %651 = vmatpush1.bf16.msra.mxu0 %v512
    %652 = vmatprep.subr.bf16.mxu0 %v517
    %653 = vmatpush1.bf16.msra.mxu0 %v516
    %654 = vmatprep.subr.bf16.mxu0 %v521
    %655 = vmatpush1.bf16.msra.mxu0 %v520
    %656 = vmatprep.mubr.bf16.mxu0 %v216
    %657 = vmatmul.mubr.bf16.gmra.mrb[0].mxu0 %v215
    %v658 = vpop.f32.mrb[0].mxu0
    %v659 = vadd.f32 %v188, %v658
    %v660 = vpop.f32.mrb[0].mxu0
    %v661 = vadd.f32 %v192, %v660
    %v662 = vpop.f32.mrb[0].mxu0
    %v663 = vadd.f32 %v188, %v662
    %v664 = vpop.f32.mrb[0].mxu0
    %v665 = vadd.f32 %v192, %v664
    %666 = vdwg.mxu0
    %667 = vmatprep.subr.bf16.mxu0 %v525
    %668 = vmatpush1.bf16.msra.mxu0 %v524
    %669 = vmatprep.subr.bf16.mxu0 %v529
    %670 = vmatpush1.bf16.msra.mxu0 %v528
    %671 = vmatprep.subr.bf16.mxu0 %v533
    %672 = vmatpush1.bf16.msra.mxu0 %v532
    %673 = vmatprep.subr.bf16.mxu0 %v537
    %674 = vmatpush1.bf16.msra.mxu0 %v536
    %675 = vmatprep.subr.bf16.mxu0 0
    %676 = vmatpush1.bf16.msra.mxu0 0
    %677 = vmatprep.subr.bf16.mxu0 0
    %678 = vmatpush1.bf16.msra.mxu0 0
    %679 = vmatprep.subr.bf16.mxu0 0
    %680 = vmatpush1.bf16.msra.mxu0 0
    %681 = vmatprep.subr.bf16.mxu0 0
    %682 = vmatpush1.bf16.msra.mxu0 0
    %683 = vmatprep.subr.bf16.mxu0 0
    %684 = vmatpush1.bf16.msra.mxu0 0
    %685 = vmatprep.subr.bf16.mxu0 0
    %686 = vmatpush1.bf16.msra.mxu0 0
    %687 = vmatprep.subr.bf16.mxu0 0
    %688 = vmatpush1.bf16.msra.mxu0 0
    %689 = vmatprep.subr.bf16.mxu0 0
    %690 = vmatpush1.bf16.msra.mxu0 0
    %691 = vmatprep.subr.bf16.mxu0 0
    %692 = vmatpush1.bf16.msra.mxu0 0
    %693 = vmatprep.subr.bf16.mxu0 0
    %694 = vmatpush1.bf16.msra.mxu0 0
    %695 = vmatprep.subr.bf16.mxu0 0
    %696 = vmatpush1.bf16.msra.mxu0 0
    %697 = vmatprep.subr.bf16.mxu0 0
    %698 = vmatpush1.bf16.msra.mxu0 0
    %699 = vmatprep.mubr.bf16.mxu0 0
    %700 = vmatmul.mubr.bf16.gmra.mrb[0].mxu0 %v622
    %v701 = vpop.f32.mrb[0].mxu0
    %v702 = vadd.f32 %v659, %v701
    %v703 = vpop.f32.mrb[0].mxu0
    %v704 = vadd.f32 %v661, %v703
    %v705 = vpop.f32.mrb[0].mxu0
    %v706 = vadd.f32 %v663, %v705
    %v707 = vpop.f32.mrb[0].mxu0
    %v708 = vadd.f32 %v665, %v707
    %709 = vdwg.mxu0
    %710 = vmatprep.subr.bf16.mxu0 %v463
    %711 = vmatpush1.bf16.msra.mxu0 %v462
    %712 = vmatprep.subr.bf16.mxu0 %v467
    %713 = vmatpush1.bf16.msra.mxu0 %v466
    %714 = vmatprep.subr.bf16.mxu0 %v471
    %715 = vmatpush1.bf16.msra.mxu0 %v470
    %716 = vmatprep.subr.bf16.mxu0 %v475
    %717 = vmatpush1.bf16.msra.mxu0 %v474
    %718 = vmatprep.subr.bf16.mxu0 %v479
    %719 = vmatpush1.bf16.msra.mxu0 %v478
    %720 = vmatprep.subr.bf16.mxu0 %v483
    %721 = vmatpush1.bf16.msra.mxu0 %v482
    %722 = vmatprep.subr.bf16.mxu0 %v487
    %723 = vmatpush1.bf16.msra.mxu0 %v486
    %724 = vmatprep.subr.bf16.mxu0 %v491
    %725 = vmatpush1.bf16.msra.mxu0 %v490
    %726 = vmatprep.subr.bf16.mxu0 %v495
    %727 = vmatpush1.bf16.msra.mxu0 %v494
    %728 = vmatprep.subr.bf16.mxu0 %v499
    %729 = vmatpush1.bf16.msra.mxu0 %v498
    %730 = vmatprep.subr.bf16.mxu0 %v503
    %731 = vmatpush1.bf16.msra.mxu0 %v502
    %732 = vmatprep.subr.bf16.mxu0 %v507
    %733 = vmatpush1.bf16.msra.mxu0 %v506
    %734 = vmatprep.subr.bf16.mxu0 %v511
    %735 = vmatpush1.bf16.msra.mxu0 %v510
    %736 = vmatprep.subr.bf16.mxu0 %v515
    %737 = vmatpush1.bf16.msra.mxu0 %v514
    %738 = vmatprep.subr.bf16.mxu0 %v519
    %739 = vmatpush1.bf16.msra.mxu0 %v518
    %740 = vmatprep.subr.bf16.mxu0 %v523
    %741 = vmatpush1.bf16.msra.mxu0 %v522
    %742 = vmatprep.mubr.bf16.mxu0 %v216
    %743 = vmatmul.mubr.bf16.gmra.mrb[0].mxu0 %v215
    %v744 = vpop.f32.mrb[0].mxu0
    %v745 = vadd.f32 %v196, %v744
    %v746 = vpop.f32.mrb[0].mxu0
    %v747 = vadd.f32 %v200, %v746
    %v748 = vpop.f32.mrb[0].mxu0
    %v749 = vadd.f32 %v196, %v748
    %v750 = vpop.f32.mrb[0].mxu0
    %v751 = vadd.f32 %v200, %v750
    %752 = vdwg.mxu0
    %753 = vmatprep.subr.bf16.mxu0 %v527
    %754 = vmatpush1.bf16.msra.mxu0 %v526
    %755 = vmatprep.subr.bf16.mxu0 %v531
    %756 = vmatpush1.bf16.msra.mxu0 %v530
    %757 = vmatprep.subr.bf16.mxu0 %v535
    %758 = vmatpush1.bf16.msra.mxu0 %v534
    %759 = vmatprep.subr.bf16.mxu0 %v539
    %760 = vmatpush1.bf16.msra.mxu0 %v538
    %761 = vmatprep.subr.bf16.mxu0 0
    %762 = vmatpush1.bf16.msra.mxu0 0
    %763 = vmatprep.subr.bf16.mxu0 0
    %764 = vmatpush1.bf16.msra.mxu0 0
    %765 = vmatprep.subr.bf16.mxu0 0
    %766 = vmatpush1.bf16.msra.mxu0 0
    %767 = vmatprep.subr.bf16.mxu0 0
    %768 = vmatpush1.bf16.msra.mxu0 0
    %769 = vmatprep.subr.bf16.mxu0 0
    %770 = vmatpush1.bf16.msra.mxu0 0
    %771 = vmatprep.subr.bf16.mxu0 0
    %772 = vmatpush1.bf16.msra.mxu0 0
    %773 = vmatprep.subr.bf16.mxu0 0
    %774 = vmatpush1.bf16.msra.mxu0 0
    %775 = vmatprep.subr.bf16.mxu0 0
    %776 = vmatpush1.bf16.msra.mxu0 0
    %777 = vmatprep.subr.bf16.mxu0 0
    %778 = vmatpush1.bf16.msra.mxu0 0
    %779 = vmatprep.subr.bf16.mxu0 0
    %780 = vmatpush1.bf16.msra.mxu0 0
    %781 = vmatprep.subr.bf16.mxu0 0
    %782 = vmatpush1.bf16.msra.mxu0 0
    %783 = vmatprep.subr.bf16.mxu0 0
    %784 = vmatpush1.bf16.msra.mxu0 0
    %785 = vmatprep.mubr.bf16.mxu0 0
    %786 = vmatmul.mubr.bf16.gmra.mrb[0].mxu0 %v622
    %v787 = vpop.f32.mrb[0].mxu0
    %v788 = vadd.f32 %v745, %v787
    %v789 = vpop.f32.mrb[0].mxu0
    %v790 = vadd.f32 %v747, %v789
    %v791 = vpop.f32.mrb[0].mxu0
    %v792 = vadd.f32 %v749, %v791
    %v793 = vpop.f32.mrb[0].mxu0
    %v794 = vadd.f32 %v751, %v793
    %795 = vdwg.mxu0
    %v796 = vadd.f32 %v702, %v704
    %v797 = vadd.f32 %v796, %v788
    %v798 = vadd.f32 %v797, %v790
    %799 = vadd.xlane.f32.xlu0 %v798
    %v800 = vpop.xlane.xlu0 %799
    %v801 = vadd.f32 %v706, %v708
    %v802 = vadd.f32 %v801, %v792
    %v803 = vadd.f32 %v802, %v794
    %804 = vadd.xlane.f32.xlu0 %v803
    %v805 = vpop.xlane.xlu0 %804
    %v806 = vmul.f32 %v702, %v702
    %v807 = vmul.f32 %v704, %v704
    %v808 = vmul.f32 %v788, %v788
    %v809 = vmul.f32 %v790, %v790
    %v810 = vmul.f32 %v706, %v706
    %v811 = vmul.f32 %v708, %v708
    %v812 = vmul.f32 %v792, %v792
    %v813 = vmul.f32 %v794, %v794
    %v814 = vadd.f32 %v806, %v807
    %v815 = vadd.f32 %v814, %v808
    %v816 = vadd.f32 %v815, %v809
    %817 = vadd.xlane.f32.xlu0 %v816
    %v818 = vpop.xlane.xlu0 %817
    %v819 = vadd.f32 %v810, %v811
    %v820 = vadd.f32 %v819, %v812
    %v821 = vadd.f32 %v820, %v813
    %822 = vadd.xlane.f32.xlu0 %v821
    %v823 = vpop.xlane.xlu0 %822
    %v824 = vmul.f32 %v800, 0.001953125
    %v825 = vmul.f32 %v805, 0.001953125
    %v826 = vmul.f32 %v818, 0.001953125
    %v827 = vmul.f32 %v823, 0.001953125
    %v828 = vmul.f32 %v824, %v824
    %v829 = vmul.f32 %v825, %v825
    %v830 = vsub.f32 %v826, %v828
    %v831 = vsub.f32 %v827, %v829
    %v832 = vsub.f32 %v702, %v824
    %v833 = vsub.f32 %v704, %v824
    %v834 = vsub.f32 %v788, %v824
    %v835 = vsub.f32 %v790, %v824
    %v836 = vsub.f32 %v706, %v825
    %v837 = vsub.f32 %v708, %v825
    %v838 = vsub.f32 %v792, %v825
    %v839 = vsub.f32 %v794, %v825
    %v840 = vadd.f32 %v830, 1e-05
    %v841 = vadd.f32 %v831, 1e-05
    %v842 = vrsqrt.pop %v840
    %v843 = vrsqrt.pop %v841
    %v844 = vmul.f32 %v832, %v842
    %v845 = vmul.f32 %v833, %v842
    %v846 = vmul.f32 %v834, %v842
    %v847 = vmul.f32 %v835, %v842
    %v848 = vmul.f32 %v836, %v843
    %v849 = vmul.f32 %v837, %v843
    %v850 = vmul.f32 %v838, %v843
    %v851 = vmul.f32 %v839, %v843
    %v853 = vlaneseq
    %v854 = vshrl.u32 %v853, 7
    %v855 = vsub.s32 0, %v854
    %v856 = vrot.slane %v90, %v855
    %v857 = vlaneseq
    %v858 = vshrl.u32 %v857, 7
    %v859 = vsub.s32 1, %v858
    %v860 = vrot.slane %v90, %v859
    %v861 = vlaneseq
    %v862 = vshrl.u32 %v861, 7
    %v863 = vsub.s32 2, %v862
    %v864 = vrot.slane %v90, %v863
    %v865 = vlaneseq
    %v866 = vshrl.u32 %v865, 7
    %v867 = vsub.s32 3, %v866
    %v868 = vrot.slane %v90, %v867
    %v873 = vmul.f32 %v844, %v856
    %v874 = vmul.f32 %v845, %v860
    %v875 = vmul.f32 %v846, %v864
    %v876 = vmul.f32 %v847, %v868
    %v877 = vmul.f32 %v848, %v856
    %v878 = vmul.f32 %v849, %v860
    %v879 = vmul.f32 %v850, %v864
    %v880 = vmul.f32 %v851, %v868
    %v882 = vlaneseq
    %v883 = vshrl.u32 %v882, 7
    %v884 = vsub.s32 0, %v883
    %v885 = vrot.slane %v92, %v884
    %v886 = vlaneseq
    %v887 = vshrl.u32 %v886, 7
    %v888 = vsub.s32 1, %v887
    %v889 = vrot.slane %v92, %v888
    %v890 = vlaneseq
    %v891 = vshrl.u32 %v890, 7
    %v892 = vsub.s32 2, %v891
    %v893 = vrot.slane %v92, %v892
    %v894 = vlaneseq
    %v895 = vshrl.u32 %v894, 7
    %v896 = vsub.s32 3, %v895
    %v897 = vrot.slane %v92, %v896
    %v902 = vadd.f32 %v873, %v885
    %v903 = vadd.f32 %v874, %v889
    %v904 = vadd.f32 %v875, %v893
    %v905 = vadd.f32 %v876, %v897
    %v906 = vadd.f32 %v877, %v885
    %v907 = vadd.f32 %v878, %v889
    %v908 = vadd.f32 %v879, %v893
    %v909 = vadd.f32 %v880, %v897
    %v910 = vxor.u32 %v902, 2147483648
    %v911 = vxor.u32 %v903, 2147483648
    %v912 = vxor.u32 %v904, 2147483648
    %v913 = vxor.u32 %v905, 2147483648
    %v914 = vxor.u32 %v906, 2147483648
    %v915 = vxor.u32 %v907, 2147483648
    %v916 = vxor.u32 %v908, 2147483648
    %v917 = vxor.u32 %v909, 2147483648
    %v918 = vmul.f32 %v910, 1.442695
    %v919 = vpow.pop %v918
    %v920 = vmul.f32 %v911, 1.442695
    %v921 = vpow.pop %v920
    %v922 = vmul.f32 %v912, 1.442695
    %v923 = vpow.pop %v922
    %v924 = vmul.f32 %v913, 1.442695
    %v925 = vpow.pop %v924
    %v926 = vmul.f32 %v914, 1.442695
    %v927 = vpow.pop %v926
    %v928 = vmul.f32 %v915, 1.442695
    %v929 = vpow.pop %v928
    %v930 = vmul.f32 %v916, 1.442695
    %v931 = vpow.pop %v930
    %v932 = vmul.f32 %v917, 1.442695
    %v933 = vpow.pop %v932
    %v934 = vadd.f32 %v919, 1.0
    %v935 = vadd.f32 %v921, 1.0
    %v936 = vadd.f32 %v923, 1.0
    %v937 = vadd.f32 %v925, 1.0
    %v938 = vadd.f32 %v927, 1.0
    %v939 = vadd.f32 %v929, 1.0
    %v940 = vadd.f32 %v931, 1.0
    %v941 = vadd.f32 %v933, 1.0
    %v942 = vrcp.pop %v934
    %v943 = vmul.f32 1.0, %v942
    %v944 = vrcp.pop %v935
    %v945 = vmul.f32 1.0, %v944
    %v946 = vrcp.pop %v936
    %v947 = vmul.f32 1.0, %v946
    %v948 = vrcp.pop %v937
    %v949 = vmul.f32 1.0, %v948
    %v950 = vrcp.pop %v938
    %v951 = vmul.f32 1.0, %v950
    %v952 = vrcp.pop %v939
    %v953 = vmul.f32 1.0, %v952
    %v954 = vrcp.pop %v940
    %v955 = vmul.f32 1.0, %v954
    %v956 = vrcp.pop %v941
    %v957 = vmul.f32 1.0, %v956
    %v958 = vmul.f32 %v902, %v943
    %v959 = vmul.f32 %v903, %v945
    %v960 = vmul.f32 %v904, %v947
    %v961 = vmul.f32 %v905, %v949
    %v962 = vmul.f32 %v906, %v951
    %v963 = vmul.f32 %v907, %v953
    %v964 = vmul.f32 %v908, %v955
    %v965 = vmul.f32 %v909, %v957
    %v966 = vpack.c.bf16 %v962, %v958
    %v967 = vpack.c.bf16 %v963, %v959
    %v968 = vpack.c.bf16 %v964, %v960
    %v969 = vpack.c.bf16 %v965, %v961
    %v970 = vld [vmem:[#allocation7] sm:$0xff]
    %v971 = vld [vmem:[#allocation7 + $0x8] sm:$0xff]
    %v972 = vld [vmem:[#allocation7 + $0x10] sm:$0xff]
    %v973 = vld [vmem:[#allocation7 + $0x18] sm:$0xff]
    %v974 = vld [vmem:[#allocation7 + $0x20] sm:$0xff]
    %v975 = vld [vmem:[#allocation7 + $0x28] sm:$0xff]
    %v976 = vld [vmem:[#allocation7 + $0x30] sm:$0xff]
    %v977 = vld [vmem:[#allocation7 + $0x38] sm:$0xff]
    %v978 = vld [vmem:[#allocation7 + $0x40] sm:$0xff]
    %v979 = vld [vmem:[#allocation7 + $0x48] sm:$0xff]
    %v980 = vld [vmem:[#allocation7 + $0x50] sm:$0xff]
    %v981 = vld [vmem:[#allocation7 + $0x58] sm:$0xff]
    %v982 = vld [vmem:[#allocation7 + $0x60] sm:$0xff]
    %v983 = vld [vmem:[#allocation7 + $0x68] sm:$0xff]
    %v984 = vld [vmem:[#allocation7 + $0x70] sm:$0xff]
    %v985 = vld [vmem:[#allocation7 + $0x78] sm:$0xff]
    %v986 = vld [vmem:[#allocation7 + $0x80] sm:$0xff]
    %v987 = vld [vmem:[#allocation7 + $0x88] sm:$0xff]
    %v988 = vld [vmem:[#allocation7 + $0x90] sm:$0xff]
    %v989 = vld [vmem:[#allocation7 + $0x98] sm:$0xff]
    %v990 = vld [vmem:[#allocation7 + $0xa0] sm:$0xff]
    %v991 = vld [vmem:[#allocation7 + $0xa8] sm:$0xff]
    %v992 = vld [vmem:[#allocation7 + $0xb0] sm:$0xff]
    %v993 = vld [vmem:[#allocation7 + $0xb8] sm:$0xff]
    %v994 = vld [vmem:[#allocation7 + $0xc0] sm:$0xff]
    %v995 = vld [vmem:[#allocation7 + $0xc8] sm:$0xff]
    %v996 = vld [vmem:[#allocation7 + $0xd0] sm:$0xff]
    %v997 = vld [vmem:[#allocation7 + $0xd8] sm:$0xff]
    %v998 = vld [vmem:[#allocation7 + $0xe0] sm:$0xff]
    %v999 = vld [vmem:[#allocation7 + $0xe8] sm:$0xff]
    %v1000 = vld [vmem:[#allocation7 + $0xf0] sm:$0xff]
    %v1001 = vld [vmem:[#allocation7 + $0xf8] sm:$0xff]
    %v1002 = vld [vmem:[#allocation7 + $0x100] sm:$0xff]
    %v1003 = vld [vmem:[#allocation7 + $0x108] sm:$0xff]
    %v1004 = vld [vmem:[#allocation7 + $0x110] sm:$0xff]
    %v1005 = vld [vmem:[#allocation7 + $0x118] sm:$0xff]
    %v1006 = vld [vmem:[#allocation7 + $0x120] sm:$0xff]
    %v1007 = vld [vmem:[#allocation7 + $0x128] sm:$0xff]
    %v1008 = vld [vmem:[#allocation7 + $0x130] sm:$0xff]
    %v1009 = vld [vmem:[#allocation7 + $0x138] sm:$0xff]
    %v1010 = vld [vmem:[#allocation7 + $0x140] sm:$0xff]
    %v1011 = vld [vmem:[#allocation7 + $0x148] sm:$0xff]
    %v1012 = vld [vmem:[#allocation7 + $0x150] sm:$0xff]
    %v1013 = vld [vmem:[#allocation7 + $0x158] sm:$0xff]
    %v1014 = vld [vmem:[#allocation7 + $0x160] sm:$0xff]
    %v1015 = vld [vmem:[#allocation7 + $0x168] sm:$0xff]
    %v1016 = vld [vmem:[#allocation7 + $0x170] sm:$0xff]
    %v1017 = vld [vmem:[#allocation7 + $0x178] sm:$0xff]
    %v1018 = vld [vmem:[#allocation7 + $0x180] sm:$0xff]
    %v1019 = vld [vmem:[#allocation7 + $0x188] sm:$0xff]
    %v1020 = vld [vmem:[#allocation7 + $0x190] sm:$0xff]
    %v1021 = vld [vmem:[#allocation7 + $0x198] sm:$0xff]
    %v1022 = vld [vmem:[#allocation7 + $0x1a0] sm:$0xff]
    %v1023 = vld [vmem:[#allocation7 + $0x1a8] sm:$0xff]
    %v1024 = vld [vmem:[#allocation7 + $0x1b0] sm:$0xff]
    %v1025 = vld [vmem:[#allocation7 + $0x1b8] sm:$0xff]
    %v1026 = vld [vmem:[#allocation7 + $0x1c0] sm:$0xff]
    %v1027 = vld [vmem:[#allocation7 + $0x1c8] sm:$0xff]
    %v1028 = vld [vmem:[#allocation7 + $0x1d0] sm:$0xff]
    %v1029 = vld [vmem:[#allocation7 + $0x1d8] sm:$0xff]
    %v1030 = vld [vmem:[#allocation7 + $0x1e0] sm:$0xff]
    %v1031 = vld [vmem:[#allocation7 + $0x1e8] sm:$0xff]
    %v1032 = vld [vmem:[#allocation7 + $0x1f0] sm:$0xff]
    %v1033 = vld [vmem:[#allocation7 + $0x1f8] sm:$0xff]
    %v1034 = vld [vmem:[#allocation7 + $0x200] sm:$0xff]
    %v1035 = vld [vmem:[#allocation7 + $0x208] sm:$0xff]
    %v1036 = vld [vmem:[#allocation7 + $0x210] sm:$0xff]
    %v1037 = vld [vmem:[#allocation7 + $0x218] sm:$0xff]
    %v1038 = vld [vmem:[#allocation7 + $0x220] sm:$0xff]
    %v1039 = vld [vmem:[#allocation7 + $0x228] sm:$0xff]
    %v1040 = vld [vmem:[#allocation7 + $0x230] sm:$0xff]
    %v1041 = vld [vmem:[#allocation7 + $0x238] sm:$0xff]
    %v1042 = vld [vmem:[#allocation7 + $0x240] sm:$0xff]
    %v1043 = vld [vmem:[#allocation7 + $0x248] sm:$0xff]
    %v1044 = vld [vmem:[#allocation7 + $0x250] sm:$0xff]
    %v1045 = vld [vmem:[#allocation7 + $0x258] sm:$0xff]
    %v1046 = vld [vmem:[#allocation7 + $0x260] sm:$0xff]
    %v1047 = vld [vmem:[#allocation7 + $0x268] sm:$0xff]
    %v1048 = vld [vmem:[#allocation7 + $0x270] sm:$0xff]
    %v1049 = vld [vmem:[#allocation7 + $0x278] sm:$0xff]
    %v1050 = vld [vmem:[#allocation7 + $0x280] sm:$0xff]
    %v1051 = vld [vmem:[#allocation7 + $0x288] sm:$0xff]
    %v1052 = vld [vmem:[#allocation7 + $0x290] sm:$0xff]
    %v1053 = vld [vmem:[#allocation7 + $0x298] sm:$0xff]
    %v1054 = vld [vmem:[#allocation7 + $0x2a0] sm:$0xff]
    %v1055 = vld [vmem:[#allocation7 + $0x2a8] sm:$0xff]
    %v1056 = vld [vmem:[#allocation7 + $0x2b0] sm:$0xff]
    %v1057 = vld [vmem:[#allocation7 + $0x2b8] sm:$0xff]
    %v1058 = vld [vmem:[#allocation7 + $0x2c0] sm:$0xff]
    %v1059 = vld [vmem:[#allocation7 + $0x2c8] sm:$0xff]
    %v1060 = vld [vmem:[#allocation7 + $0x2d0] sm:$0xff]
    %v1061 = vld [vmem:[#allocation7 + $0x2d8] sm:$0xff]
    %v1062 = vld [vmem:[#allocation7 + $0x2e0] sm:$0xff]
    %v1063 = vld [vmem:[#allocation7 + $0x2e8] sm:$0xff]
    %v1064 = vld [vmem:[#allocation7 + $0x2f0] sm:$0xff]
    %v1065 = vld [vmem:[#allocation7 + $0x2f8] sm:$0xff]
    %v1066 = vld [vmem:[#allocation7 + $0x300] sm:$0xff]
    %v1067 = vld [vmem:[#allocation7 + $0x308] sm:$0xff]
    %v1068 = vld [vmem:[#allocation7 + $0x310] sm:$0xff]
    %v1069 = vld [vmem:[#allocation7 + $0x318] sm:$0xff]
    %v1070 = vld [vmem:[#allocation7 + $0x320] sm:$0xff]
    %v1071 = vld [vmem:[#allocation7 + $0x328] sm:$0xff]
    %v1072 = vld [vmem:[#allocation7 + $0x330] sm:$0xff]
    %v1073 = vld [vmem:[#allocation7 + $0x338] sm:$0xff]
    %v1074 = vld [vmem:[#allocation7 + $0x340] sm:$0xff]
    %v1075 = vld [vmem:[#allocation7 + $0x348] sm:$0xff]
    %v1076 = vld [vmem:[#allocation7 + $0x350] sm:$0xff]
    %v1077 = vld [vmem:[#allocation7 + $0x358] sm:$0xff]
    %v1078 = vld [vmem:[#allocation7 + $0x360] sm:$0xff]
    %v1079 = vld [vmem:[#allocation7 + $0x368] sm:$0xff]
    %v1080 = vld [vmem:[#allocation7 + $0x370] sm:$0xff]
    %v1081 = vld [vmem:[#allocation7 + $0x378] sm:$0xff]
    %v1082 = vld [vmem:[#allocation7 + $0x380] sm:$0xff]
    %v1083 = vld [vmem:[#allocation7 + $0x388] sm:$0xff]
    %v1084 = vld [vmem:[#allocation7 + $0x390] sm:$0xff]
    %v1085 = vld [vmem:[#allocation7 + $0x398] sm:$0xff]
    %v1086 = vld [vmem:[#allocation7 + $0x3a0] sm:$0xff]
    %v1087 = vld [vmem:[#allocation7 + $0x3a8] sm:$0xff]
    %v1088 = vld [vmem:[#allocation7 + $0x3b0] sm:$0xff]
    %v1089 = vld [vmem:[#allocation7 + $0x3b8] sm:$0xff]
    %v1090 = vld [vmem:[#allocation7 + $0x3c0] sm:$0xff]
    %v1091 = vld [vmem:[#allocation7 + $0x3c8] sm:$0xff]
    %v1092 = vld [vmem:[#allocation7 + $0x3d0] sm:$0xff]
    %v1093 = vld [vmem:[#allocation7 + $0x3d8] sm:$0xff]
    %v1094 = vld [vmem:[#allocation7 + $0x3e0] sm:$0xff]
    %v1095 = vld [vmem:[#allocation7 + $0x3e8] sm:$0xff]
    %v1096 = vld [vmem:[#allocation7 + $0x3f0] sm:$0xff]
    %v1097 = vld [vmem:[#allocation7 + $0x3f8] sm:$0xff]
    %v1099 = vlaneseq
    %v1100 = vshrl.u32 %v1099, 7
    %v1101 = vsub.s32 0, %v1100
    %v1102 = vrot.slane %v94, %v1101
    %v1103 = vlaneseq
    %v1104 = vshrl.u32 %v1103, 7
    %v1105 = vsub.s32 1, %v1104
    %v1106 = vrot.slane %v94, %v1105
    %v1107 = vlaneseq
    %v1108 = vshrl.u32 %v1107, 7
    %v1109 = vsub.s32 2, %v1108
    %v1110 = vrot.slane %v94, %v1109
    %v1111 = vlaneseq
    %v1112 = vshrl.u32 %v1111, 7
    %v1113 = vsub.s32 3, %v1112
    %v1114 = vrot.slane %v94, %v1113
    %v1247 = vunpack.c.l.b16 %v970
    %v1248 = vunpack.c.h.b16 %v970
    %v1249 = vunpack.c.l.b16 %v971
    %v1250 = vunpack.c.h.b16 %v971
    %v1251 = vunpack.c.l.b16 %v972
    %v1252 = vunpack.c.h.b16 %v972
    %v1253 = vunpack.c.l.b16 %v973
    %v1254 = vunpack.c.h.b16 %v973
    %v1255 = vunpack.c.l.b16 %v974
    %v1256 = vunpack.c.h.b16 %v974
    %v1257 = vunpack.c.l.b16 %v975
    %v1258 = vunpack.c.h.b16 %v975
    %v1259 = vunpack.c.l.b16 %v976
    %v1260 = vunpack.c.h.b16 %v976
    %v1261 = vunpack.c.l.b16 %v977
    %v1262 = vunpack.c.h.b16 %v977
    %v1263 = vunpack.c.l.b16 %v978
    %v1264 = vunpack.c.h.b16 %v978
    %v1265 = vunpack.c.l.b16 %v979
    %v1266 = vunpack.c.h.b16 %v979
    %v1267 = vunpack.c.l.b16 %v980
    %v1268 = vunpack.c.h.b16 %v980
    %v1269 = vunpack.c.l.b16 %v981
    %v1270 = vunpack.c.h.b16 %v981
    %v1271 = vunpack.c.l.b16 %v982
    %v1272 = vunpack.c.h.b16 %v982
    %v1273 = vunpack.c.l.b16 %v983
    %v1274 = vunpack.c.h.b16 %v983
    %v1275 = vunpack.c.l.b16 %v984
    %v1276 = vunpack.c.h.b16 %v984
    %v1277 = vunpack.c.l.b16 %v985
    %v1278 = vunpack.c.h.b16 %v985
    %v1279 = vunpack.c.l.b16 %v986
    %v1280 = vunpack.c.h.b16 %v986
    %v1281 = vunpack.c.l.b16 %v987
    %v1282 = vunpack.c.h.b16 %v987
    %v1283 = vunpack.c.l.b16 %v988
    %v1284 = vunpack.c.h.b16 %v988
    %v1285 = vunpack.c.l.b16 %v989
    %v1286 = vunpack.c.h.b16 %v989
    %v1287 = vunpack.c.l.b16 %v990
    %v1288 = vunpack.c.h.b16 %v990
    %v1289 = vunpack.c.l.b16 %v991
    %v1290 = vunpack.c.h.b16 %v991
    %v1291 = vunpack.c.l.b16 %v992
    %v1292 = vunpack.c.h.b16 %v992
    %v1293 = vunpack.c.l.b16 %v993
    %v1294 = vunpack.c.h.b16 %v993
    %v1295 = vunpack.c.l.b16 %v994
    %v1296 = vunpack.c.h.b16 %v994
    %v1297 = vunpack.c.l.b16 %v995
    %v1298 = vunpack.c.h.b16 %v995
    %v1299 = vunpack.c.l.b16 %v996
    %v1300 = vunpack.c.h.b16 %v996
    %v1301 = vunpack.c.l.b16 %v997
    %v1302 = vunpack.c.h.b16 %v997
    %v1303 = vunpack.c.l.b16 %v998
    %v1304 = vunpack.c.h.b16 %v998
    %v1305 = vunpack.c.l.b16 %v999
    %v1306 = vunpack.c.h.b16 %v999
    %v1307 = vunpack.c.l.b16 %v1000
    %v1308 = vunpack.c.h.b16 %v1000
    %v1309 = vunpack.c.l.b16 %v1001
    %v1310 = vunpack.c.h.b16 %v1001
    %v1311 = vunpack.c.l.b16 %v1002
    %v1312 = vunpack.c.h.b16 %v1002
    %v1313 = vunpack.c.l.b16 %v1003
    %v1314 = vunpack.c.h.b16 %v1003
    %v1315 = vunpack.c.l.b16 %v1004
    %v1316 = vunpack.c.h.b16 %v1004
    %v1317 = vunpack.c.l.b16 %v1005
    %v1318 = vunpack.c.h.b16 %v1005
    %v1319 = vunpack.c.l.b16 %v1006
    %v1320 = vunpack.c.h.b16 %v1006
    %v1321 = vunpack.c.l.b16 %v1007
    %v1322 = vunpack.c.h.b16 %v1007
    %v1323 = vunpack.c.l.b16 %v1008
    %v1324 = vunpack.c.h.b16 %v1008
    %v1325 = vunpack.c.l.b16 %v1009
    %v1326 = vunpack.c.h.b16 %v1009
    %v1327 = vunpack.c.l.b16 %v1010
    %v1328 = vunpack.c.h.b16 %v1010
    %v1329 = vunpack.c.l.b16 %v1011
    %v1330 = vunpack.c.h.b16 %v1011
    %v1331 = vunpack.c.l.b16 %v1012
    %v1332 = vunpack.c.h.b16 %v1012
    %v1333 = vunpack.c.l.b16 %v1013
    %v1334 = vunpack.c.h.b16 %v1013
    %v1335 = vunpack.c.l.b16 %v1014
    %v1336 = vunpack.c.h.b16 %v1014
    %v1337 = vunpack.c.l.b16 %v1015
    %v1338 = vunpack.c.h.b16 %v1015
    %v1339 = vunpack.c.l.b16 %v1016
    %v1340 = vunpack.c.h.b16 %v1016
    %v1341 = vunpack.c.l.b16 %v1017
    %v1342 = vunpack.c.h.b16 %v1017
    %v1343 = vunpack.c.l.b16 %v1018
    %v1344 = vunpack.c.h.b16 %v1018
    %v1345 = vunpack.c.l.b16 %v1019
    %v1346 = vunpack.c.h.b16 %v1019
    %v1347 = vunpack.c.l.b16 %v1020
    %v1348 = vunpack.c.h.b16 %v1020
    %v1349 = vunpack.c.l.b16 %v1021
    %v1350 = vunpack.c.h.b16 %v1021
    %v1351 = vunpack.c.l.b16 %v1022
    %v1352 = vunpack.c.h.b16 %v1022
    %v1353 = vunpack.c.l.b16 %v1023
    %v1354 = vunpack.c.h.b16 %v1023
    %v1355 = vunpack.c.l.b16 %v1024
    %v1356 = vunpack.c.h.b16 %v1024
    %v1357 = vunpack.c.l.b16 %v1025
    %v1358 = vunpack.c.h.b16 %v1025
    %v1359 = vunpack.c.l.b16 %v1026
    %v1360 = vunpack.c.h.b16 %v1026
    %v1361 = vunpack.c.l.b16 %v1027
    %v1362 = vunpack.c.h.b16 %v1027
    %v1363 = vunpack.c.l.b16 %v1028
    %v1364 = vunpack.c.h.b16 %v1028
    %v1365 = vunpack.c.l.b16 %v1029
    %v1366 = vunpack.c.h.b16 %v1029
    %v1367 = vunpack.c.l.b16 %v1030
    %v1368 = vunpack.c.h.b16 %v1030
    %v1369 = vunpack.c.l.b16 %v1031
    %v1370 = vunpack.c.h.b16 %v1031
    %v1371 = vunpack.c.l.b16 %v1032
    %v1372 = vunpack.c.h.b16 %v1032
    %v1373 = vunpack.c.l.b16 %v1033
    %v1374 = vunpack.c.h.b16 %v1033
    %v1375 = vunpack.c.l.b16 %v1034
    %v1376 = vunpack.c.h.b16 %v1034
    %v1377 = vunpack.c.l.b16 %v1035
    %v1378 = vunpack.c.h.b16 %v1035
    %v1379 = vunpack.c.l.b16 %v1036
    %v1380 = vunpack.c.h.b16 %v1036
    %v1381 = vunpack.c.l.b16 %v1037
    %v1382 = vunpack.c.h.b16 %v1037
    %v1383 = vunpack.c.l.b16 %v1038
    %v1384 = vunpack.c.h.b16 %v1038
    %v1385 = vunpack.c.l.b16 %v1039
    %v1386 = vunpack.c.h.b16 %v1039
    %v1387 = vunpack.c.l.b16 %v1040
    %v1388 = vunpack.c.h.b16 %v1040
    %v1389 = vunpack.c.l.b16 %v1041
    %v1390 = vunpack.c.h.b16 %v1041
    %v1391 = vunpack.c.l.b16 %v1042
    %v1392 = vunpack.c.h.b16 %v1042
    %v1393 = vunpack.c.l.b16 %v1043
    %v1394 = vunpack.c.h.b16 %v1043
    %v1395 = vunpack.c.l.b16 %v1044
    %v1396 = vunpack.c.h.b16 %v1044
    %v1397 = vunpack.c.l.b16 %v1045
    %v1398 = vunpack.c.h.b16 %v1045
    %v1399 = vunpack.c.l.b16 %v1046
    %v1400 = vunpack.c.h.b16 %v1046
    %v1401 = vunpack.c.l.b16 %v1047
    %v1402 = vunpack.c.h.b16 %v1047
    %v1403 = vunpack.c.l.b16 %v1048
    %v1404 = vunpack.c.h.b16 %v1048
    %v1405 = vunpack.c.l.b16 %v1049
    %v1406 = vunpack.c.h.b16 %v1049
    %v1407 = vunpack.c.l.b16 %v1050
    %v1408 = vunpack.c.h.b16 %v1050
    %v1409 = vunpack.c.l.b16 %v1051
    %v1410 = vunpack.c.h.b16 %v1051
    %v1411 = vunpack.c.l.b16 %v1052
    %v1412 = vunpack.c.h.b16 %v1052
    %v1413 = vunpack.c.l.b16 %v1053
    %v1414 = vunpack.c.h.b16 %v1053
    %v1415 = vunpack.c.l.b16 %v1054
    %v1416 = vunpack.c.h.b16 %v1054
    %v1417 = vunpack.c.l.b16 %v1055
    %v1418 = vunpack.c.h.b16 %v1055
    %v1419 = vunpack.c.l.b16 %v1056
    %v1420 = vunpack.c.h.b16 %v1056
    %v1421 = vunpack.c.l.b16 %v1057
    %v1422 = vunpack.c.h.b16 %v1057
    %v1423 = vunpack.c.l.b16 %v1058
    %v1424 = vunpack.c.h.b16 %v1058
    %v1425 = vunpack.c.l.b16 %v1059
    %v1426 = vunpack.c.h.b16 %v1059
    %v1427 = vunpack.c.l.b16 %v1060
    %v1428 = vunpack.c.h.b16 %v1060
    %v1429 = vunpack.c.l.b16 %v1061
    %v1430 = vunpack.c.h.b16 %v1061
    %v1431 = vunpack.c.l.b16 %v1062
    %v1432 = vunpack.c.h.b16 %v1062
    %v1433 = vunpack.c.l.b16 %v1063
    %v1434 = vunpack.c.h.b16 %v1063
    %v1435 = vunpack.c.l.b16 %v1064
    %v1436 = vunpack.c.h.b16 %v1064
    %v1437 = vunpack.c.l.b16 %v1065
    %v1438 = vunpack.c.h.b16 %v1065
    %v1439 = vunpack.c.l.b16 %v1066
    %v1440 = vunpack.c.h.b16 %v1066
    %v1441 = vunpack.c.l.b16 %v1067
    %v1442 = vunpack.c.h.b16 %v1067
    %v1443 = vunpack.c.l.b16 %v1068
    %v1444 = vunpack.c.h.b16 %v1068
    %v1445 = vunpack.c.l.b16 %v1069
    %v1446 = vunpack.c.h.b16 %v1069
    %v1447 = vunpack.c.l.b16 %v1070
    %v1448 = vunpack.c.h.b16 %v1070
    %v1449 = vunpack.c.l.b16 %v1071
    %v1450 = vunpack.c.h.b16 %v1071
    %v1451 = vunpack.c.l.b16 %v1072
    %v1452 = vunpack.c.h.b16 %v1072
    %v1453 = vunpack.c.l.b16 %v1073
    %v1454 = vunpack.c.h.b16 %v1073
    %v1455 = vunpack.c.l.b16 %v1074
    %v1456 = vunpack.c.h.b16 %v1074
    %v1457 = vunpack.c.l.b16 %v1075
    %v1458 = vunpack.c.h.b16 %v1075
    %v1459 = vunpack.c.l.b16 %v1076
    %v1460 = vunpack.c.h.b16 %v1076
    %v1461 = vunpack.c.l.b16 %v1077
    %v1462 = vunpack.c.h.b16 %v1077
    %v1463 = vunpack.c.l.b16 %v1078
    %v1464 = vunpack.c.h.b16 %v1078
    %v1465 = vunpack.c.l.b16 %v1079
    %v1466 = vunpack.c.h.b16 %v1079
    %v1467 = vunpack.c.l.b16 %v1080
    %v1468 = vunpack.c.h.b16 %v1080
    %v1469 = vunpack.c.l.b16 %v1081
    %v1470 = vunpack.c.h.b16 %v1081
    %v1471 = vunpack.c.l.b16 %v1082
    %v1472 = vunpack.c.h.b16 %v1082
    %v1473 = vunpack.c.l.b16 %v1083
    %v1474 = vunpack.c.h.b16 %v1083
    %v1475 = vunpack.c.l.b16 %v1084
    %v1476 = vunpack.c.h.b16 %v1084
    %v1477 = vunpack.c.l.b16 %v1085
    %v1478 = vunpack.c.h.b16 %v1085
    %v1479 = vunpack.c.l.b16 %v1086
    %v1480 = vunpack.c.h.b16 %v1086
    %v1481 = vunpack.c.l.b16 %v1087
    %v1482 = vunpack.c.h.b16 %v1087
    %v1483 = vunpack.c.l.b16 %v1088
    %v1484 = vunpack.c.h.b16 %v1088
    %v1485 = vunpack.c.l.b16 %v1089
    %v1486 = vunpack.c.h.b16 %v1089
    %v1487 = vunpack.c.l.b16 %v1090
    %v1488 = vunpack.c.h.b16 %v1090
    %v1489 = vunpack.c.l.b16 %v1091
    %v1490 = vunpack.c.h.b16 %v1091
    %v1491 = vunpack.c.l.b16 %v1092
    %v1492 = vunpack.c.h.b16 %v1092
    %v1493 = vunpack.c.l.b16 %v1093
    %v1494 = vunpack.c.h.b16 %v1093
    %v1495 = vunpack.c.l.b16 %v1094
    %v1496 = vunpack.c.h.b16 %v1094
    %v1497 = vunpack.c.l.b16 %v1095
    %v1498 = vunpack.c.h.b16 %v1095
    %v1499 = vunpack.c.l.b16 %v1096
    %v1500 = vunpack.c.h.b16 %v1096
    %v1501 = vunpack.c.l.b16 %v1097
    %v1502 = vunpack.c.h.b16 %v1097
    %v1503 = vpack.c.b16 %v1251, %v1247
    %v1504 = vpack.c.b16 %v1252, %v1248
    %v1505 = vpack.c.b16 %v1253, %v1249
    %v1506 = vpack.c.b16 %v1254, %v1250
    %v1507 = vpack.c.b16 %v1259, %v1255
    %v1508 = vpack.c.b16 %v1260, %v1256
    %v1509 = vpack.c.b16 %v1261, %v1257
    %v1510 = vpack.c.b16 %v1262, %v1258
    %v1511 = vpack.c.b16 %v1267, %v1263
    %v1512 = vpack.c.b16 %v1268, %v1264
    %v1513 = vpack.c.b16 %v1269, %v1265
    %v1514 = vpack.c.b16 %v1270, %v1266
    %v1515 = vpack.c.b16 %v1275, %v1271
    %v1516 = vpack.c.b16 %v1276, %v1272
    %v1517 = vpack.c.b16 %v1277, %v1273
    %v1518 = vpack.c.b16 %v1278, %v1274
    %v1519 = vpack.c.b16 %v1283, %v1279
    %v1520 = vpack.c.b16 %v1284, %v1280
    %v1521 = vpack.c.b16 %v1285, %v1281
    %v1522 = vpack.c.b16 %v1286, %v1282
    %v1523 = vpack.c.b16 %v1291, %v1287
    %v1524 = vpack.c.b16 %v1292, %v1288
    %v1525 = vpack.c.b16 %v1293, %v1289
    %v1526 = vpack.c.b16 %v1294, %v1290
    %v1527 = vpack.c.b16 %v1299, %v1295
    %v1528 = vpack.c.b16 %v1300, %v1296
    %v1529 = vpack.c.b16 %v1301, %v1297
    %v1530 = vpack.c.b16 %v1302, %v1298
    %v1531 = vpack.c.b16 %v1307, %v1303
    %v1532 = vpack.c.b16 %v1308, %v1304
    %v1533 = vpack.c.b16 %v1309, %v1305
    %v1534 = vpack.c.b16 %v1310, %v1306
    %v1535 = vpack.c.b16 %v1315, %v1311
    %v1536 = vpack.c.b16 %v1316, %v1312
    %v1537 = vpack.c.b16 %v1317, %v1313
    %v1538 = vpack.c.b16 %v1318, %v1314
    %v1539 = vpack.c.b16 %v1323, %v1319
    %v1540 = vpack.c.b16 %v1324, %v1320
    %v1541 = vpack.c.b16 %v1325, %v1321
    %v1542 = vpack.c.b16 %v1326, %v1322
    %v1543 = vpack.c.b16 %v1331, %v1327
    %v1544 = vpack.c.b16 %v1332, %v1328
    %v1545 = vpack.c.b16 %v1333, %v1329
    %v1546 = vpack.c.b16 %v1334, %v1330
    %v1547 = vpack.c.b16 %v1339, %v1335
    %v1548 = vpack.c.b16 %v1340, %v1336
    %v1549 = vpack.c.b16 %v1341, %v1337
    %v1550 = vpack.c.b16 %v1342, %v1338
    %v1551 = vpack.c.b16 %v1347, %v1343
    %v1552 = vpack.c.b16 %v1348, %v1344
    %v1553 = vpack.c.b16 %v1349, %v1345
    %v1554 = vpack.c.b16 %v1350, %v1346
    %v1555 = vpack.c.b16 %v1355, %v1351
    %v1556 = vpack.c.b16 %v1356, %v1352
    %v1557 = vpack.c.b16 %v1357, %v1353
    %v1558 = vpack.c.b16 %v1358, %v1354
    %v1559 = vpack.c.b16 %v1363, %v1359
    %v1560 = vpack.c.b16 %v1364, %v1360
    %v1561 = vpack.c.b16 %v1365, %v1361
    %v1562 = vpack.c.b16 %v1366, %v1362
    %v1563 = vpack.c.b16 %v1371, %v1367
    %v1564 = vpack.c.b16 %v1372, %v1368
    %v1565 = vpack.c.b16 %v1373, %v1369
    %v1566 = vpack.c.b16 %v1374, %v1370
    %v1567 = vpack.c.b16 %v1379, %v1375
    %v1568 = vpack.c.b16 %v1380, %v1376
    %v1569 = vpack.c.b16 %v1381, %v1377
    %v1570 = vpack.c.b16 %v1382, %v1378
    %v1571 = vpack.c.b16 %v1387, %v1383
    %v1572 = vpack.c.b16 %v1388, %v1384
    %v1573 = vpack.c.b16 %v1389, %v1385
    %v1574 = vpack.c.b16 %v1390, %v1386
    %v1575 = vpack.c.b16 %v1395, %v1391
    %v1576 = vpack.c.b16 %v1396, %v1392
    %v1577 = vpack.c.b16 %v1397, %v1393
    %v1578 = vpack.c.b16 %v1398, %v1394
    %v1579 = vpack.c.b16 %v1403, %v1399
    %v1580 = vpack.c.b16 %v1404, %v1400
    %v1581 = vpack.c.b16 %v1405, %v1401
    %v1582 = vpack.c.b16 %v1406, %v1402
    %v1583 = vpack.c.b16 %v1411, %v1407
    %v1584 = vpack.c.b16 %v1412, %v1408
    %v1585 = vpack.c.b16 %v1413, %v1409
    %v1586 = vpack.c.b16 %v1414, %v1410
    %v1587 = vpack.c.b16 %v1419, %v1415
    %v1588 = vpack.c.b16 %v1420, %v1416
    %v1589 = vpack.c.b16 %v1421, %v1417
    %v1590 = vpack.c.b16 %v1422, %v1418
    %v1591 = vpack.c.b16 %v1427, %v1423
    %v1592 = vpack.c.b16 %v1428, %v1424
    %v1593 = vpack.c.b16 %v1429, %v1425
    %v1594 = vpack.c.b16 %v1430, %v1426
    %v1595 = vpack.c.b16 %v1435, %v1431
    %v1596 = vpack.c.b16 %v1436, %v1432
    %v1597 = vpack.c.b16 %v1437, %v1433
    %v1598 = vpack.c.b16 %v1438, %v1434
    %v1599 = vpack.c.b16 %v1443, %v1439
    %v1600 = vpack.c.b16 %v1444, %v1440
    %v1601 = vpack.c.b16 %v1445, %v1441
    %v1602 = vpack.c.b16 %v1446, %v1442
    %v1603 = vpack.c.b16 %v1451, %v1447
    %v1604 = vpack.c.b16 %v1452, %v1448
    %v1605 = vpack.c.b16 %v1453, %v1449
    %v1606 = vpack.c.b16 %v1454, %v1450
    %v1607 = vpack.c.b16 %v1459, %v1455
    %v1608 = vpack.c.b16 %v1460, %v1456
    %v1609 = vpack.c.b16 %v1461, %v1457
    %v1610 = vpack.c.b16 %v1462, %v1458
    %v1611 = vpack.c.b16 %v1467, %v1463
    %v1612 = vpack.c.b16 %v1468, %v1464
    %v1613 = vpack.c.b16 %v1469, %v1465
    %v1614 = vpack.c.b16 %v1470, %v1466
    %v1615 = vpack.c.b16 %v1475, %v1471
    %v1616 = vpack.c.b16 %v1476, %v1472
    %v1617 = vpack.c.b16 %v1477, %v1473
    %v1618 = vpack.c.b16 %v1478, %v1474
    %v1619 = vpack.c.b16 %v1483, %v1479
    %v1620 = vpack.c.b16 %v1484, %v1480
    %v1621 = vpack.c.b16 %v1485, %v1481
    %v1622 = vpack.c.b16 %v1486, %v1482
    %v1623 = vpack.c.b16 %v1491, %v1487
    %v1624 = vpack.c.b16 %v1492, %v1488
    %v1625 = vpack.c.b16 %v1493, %v1489
    %v1626 = vpack.c.b16 %v1494, %v1490
    %v1627 = vpack.c.b16 %v1499, %v1495
    %v1628 = vpack.c.b16 %v1500, %v1496
    %v1629 = vpack.c.b16 %v1501, %v1497
    %v1630 = vpack.c.b16 %v1502, %v1498
    %1759 = vmatprep.subr.bf16.mxu0 %v1504
    %1760 = vmatpush1.bf16.msra.mxu0 %v1503
    %1761 = vmatprep.subr.bf16.mxu0 %v1508
    %1762 = vmatpush1.bf16.msra.mxu0 %v1507
    %1763 = vmatprep.subr.bf16.mxu0 %v1512
    %1764 = vmatpush1.bf16.msra.mxu0 %v1511
    %1765 = vmatprep.subr.bf16.mxu0 %v1516
    %1766 = vmatpush1.bf16.msra.mxu0 %v1515
    %1767 = vmatprep.subr.bf16.mxu0 %v1520
    %1768 = vmatpush1.bf16.msra.mxu0 %v1519
    %1769 = vmatprep.subr.bf16.mxu0 %v1524
    %1770 = vmatpush1.bf16.msra.mxu0 %v1523
    %1771 = vmatprep.subr.bf16.mxu0 %v1528
    %1772 = vmatpush1.bf16.msra.mxu0 %v1527
    %1773 = vmatprep.subr.bf16.mxu0 %v1532
    %1774 = vmatpush1.bf16.msra.mxu0 %v1531
    %1775 = vmatprep.subr.bf16.mxu0 %v1536
    %1776 = vmatpush1.bf16.msra.mxu0 %v1535
    %1777 = vmatprep.subr.bf16.mxu0 %v1540
    %1778 = vmatpush1.bf16.msra.mxu0 %v1539
    %1779 = vmatprep.subr.bf16.mxu0 %v1544
    %1780 = vmatpush1.bf16.msra.mxu0 %v1543
    %1781 = vmatprep.subr.bf16.mxu0 %v1548
    %1782 = vmatpush1.bf16.msra.mxu0 %v1547
    %1783 = vmatprep.subr.bf16.mxu0 %v1552
    %1784 = vmatpush1.bf16.msra.mxu0 %v1551
    %1785 = vmatprep.subr.bf16.mxu0 %v1556
    %1786 = vmatpush1.bf16.msra.mxu0 %v1555
    %1787 = vmatprep.subr.bf16.mxu0 %v1560
    %1788 = vmatpush1.bf16.msra.mxu0 %v1559
    %1789 = vmatprep.subr.bf16.mxu0 %v1564
    %1790 = vmatpush1.bf16.msra.mxu0 %v1563
    %1791 = vmatprep.mubr.bf16.mxu0 %v967
    %1792 = vmatmul.mubr.bf16.gmra.mrb[0].mxu0 %v966
    %v1793 = vpop.f32.mrb[0].mxu0
    %v1794 = vadd.f32 %v1102, %v1793
    %v1795 = vpop.f32.mrb[0].mxu0
    %v1796 = vadd.f32 %v1106, %v1795
    %v1797 = vpop.f32.mrb[0].mxu0
    %v1798 = vadd.f32 %v1102, %v1797
    %v1799 = vpop.f32.mrb[0].mxu0
    %v1800 = vadd.f32 %v1106, %v1799
    %1801 = vdwg.mxu0
    %1802 = vmatprep.subr.bf16.mxu0 %v1568
    %1803 = vmatpush1.bf16.msra.mxu0 %v1567
    %1804 = vmatprep.subr.bf16.mxu0 %v1572
    %1805 = vmatpush1.bf16.msra.mxu0 %v1571
    %1806 = vmatprep.subr.bf16.mxu0 %v1576
    %1807 = vmatpush1.bf16.msra.mxu0 %v1575
    %1808 = vmatprep.subr.bf16.mxu0 %v1580
    %1809 = vmatpush1.bf16.msra.mxu0 %v1579
    %1810 = vmatprep.subr.bf16.mxu0 %v1584
    %1811 = vmatpush1.bf16.msra.mxu0 %v1583
    %1812 = vmatprep.subr.bf16.mxu0 %v1588
    %1813 = vmatpush1.bf16.msra.mxu0 %v1587
    %1814 = vmatprep.subr.bf16.mxu0 %v1592
    %1815 = vmatpush1.bf16.msra.mxu0 %v1591
    %1816 = vmatprep.subr.bf16.mxu0 %v1596
    %1817 = vmatpush1.bf16.msra.mxu0 %v1595
    %1818 = vmatprep.subr.bf16.mxu0 %v1600
    %1819 = vmatpush1.bf16.msra.mxu0 %v1599
    %1820 = vmatprep.subr.bf16.mxu0 %v1604
    %1821 = vmatpush1.bf16.msra.mxu0 %v1603
    %1822 = vmatprep.subr.bf16.mxu0 %v1608
    %1823 = vmatpush1.bf16.msra.mxu0 %v1607
    %1824 = vmatprep.subr.bf16.mxu0 %v1612
    %1825 = vmatpush1.bf16.msra.mxu0 %v1611
    %1826 = vmatprep.subr.bf16.mxu0 %v1616
    %1827 = vmatpush1.bf16.msra.mxu0 %v1615
    %1828 = vmatprep.subr.bf16.mxu0 %v1620
    %1829 = vmatpush1.bf16.msra.mxu0 %v1619
    %1830 = vmatprep.subr.bf16.mxu0 %v1624
    %1831 = vmatpush1.bf16.msra.mxu0 %v1623
    %1832 = vmatprep.subr.bf16.mxu0 %v1628
    %1833 = vmatpush1.bf16.msra.mxu0 %v1627
    %1834 = vmatprep.mubr.bf16.mxu0 %v969
    %1835 = vmatmul.mubr.bf16.gmra.mrb[0].mxu0 %v968
    %v1836 = vpop.f32.mrb[0].mxu0
    %v1837 = vadd.f32 %v1794, %v1836
    %v1838 = vpop.f32.mrb[0].mxu0
    %v1839 = vadd.f32 %v1796, %v1838
    %v1840 = vpop.f32.mrb[0].mxu0
    %v1841 = vadd.f32 %v1798, %v1840
    %v1842 = vpop.f32.mrb[0].mxu0
    %v1843 = vadd.f32 %v1800, %v1842
    %1844 = vdwg.mxu0
    %1845 = vmatprep.subr.bf16.mxu0 %v1506
    %1846 = vmatpush1.bf16.msra.mxu0 %v1505
    %1847 = vmatprep.subr.bf16.mxu0 %v1510
    %1848 = vmatpush1.bf16.msra.mxu0 %v1509
    %1849 = vmatprep.subr.bf16.mxu0 %v1514
    %1850 = vmatpush1.bf16.msra.mxu0 %v1513
    %1851 = vmatprep.subr.bf16.mxu0 %v1518
    %1852 = vmatpush1.bf16.msra.mxu0 %v1517
    %1853 = vmatprep.subr.bf16.mxu0 %v1522
    %1854 = vmatpush1.bf16.msra.mxu0 %v1521
    %1855 = vmatprep.subr.bf16.mxu0 %v1526
    %1856 = vmatpush1.bf16.msra.mxu0 %v1525
    %1857 = vmatprep.subr.bf16.mxu0 %v1530
    %1858 = vmatpush1.bf16.msra.mxu0 %v1529
    %1859 = vmatprep.subr.bf16.mxu0 %v1534
    %1860 = vmatpush1.bf16.msra.mxu0 %v1533
    %1861 = vmatprep.subr.bf16.mxu0 %v1538
    %1862 = vmatpush1.bf16.msra.mxu0 %v1537
    %1863 = vmatprep.subr.bf16.mxu0 %v1542
    %1864 = vmatpush1.bf16.msra.mxu0 %v1541
    %1865 = vmatprep.subr.bf16.mxu0 %v1546
    %1866 = vmatpush1.bf16.msra.mxu0 %v1545
    %1867 = vmatprep.subr.bf16.mxu0 %v1550
    %1868 = vmatpush1.bf16.msra.mxu0 %v1549
    %1869 = vmatprep.subr.bf16.mxu0 %v1554
    %1870 = vmatpush1.bf16.msra.mxu0 %v1553
    %1871 = vmatprep.subr.bf16.mxu0 %v1558
    %1872 = vmatpush1.bf16.msra.mxu0 %v1557
    %1873 = vmatprep.subr.bf16.mxu0 %v1562
    %1874 = vmatpush1.bf16.msra.mxu0 %v1561
    %1875 = vmatprep.subr.bf16.mxu0 %v1566
    %1876 = vmatpush1.bf16.msra.mxu0 %v1565
    %1877 = vmatprep.mubr.bf16.mxu0 %v967
    %1878 = vmatmul.mubr.bf16.gmra.mrb[0].mxu0 %v966
    %v1879 = vpop.f32.mrb[0].mxu0
    %v1880 = vadd.f32 %v1110, %v1879
    %v1881 = vpop.f32.mrb[0].mxu0
    %v1882 = vadd.f32 %v1114, %v1881
    %v1883 = vpop.f32.mrb[0].mxu0
    %v1884 = vadd.f32 %v1110, %v1883
    %v1885 = vpop.f32.mrb[0].mxu0
    %v1886 = vadd.f32 %v1114, %v1885
    %1887 = vdwg.mxu0
    %1888 = vmatprep.subr.bf16.mxu0 %v1570
    %1889 = vmatpush1.bf16.msra.mxu0 %v1569
    %1890 = vmatprep.subr.bf16.mxu0 %v1574
    %1891 = vmatpush1.bf16.msra.mxu0 %v1573
    %1892 = vmatprep.subr.bf16.mxu0 %v1578
    %1893 = vmatpush1.bf16.msra.mxu0 %v1577
    %1894 = vmatprep.subr.bf16.mxu0 %v1582
    %1895 = vmatpush1.bf16.msra.mxu0 %v1581
    %1896 = vmatprep.subr.bf16.mxu0 %v1586
    %1897 = vmatpush1.bf16.msra.mxu0 %v1585
    %1898 = vmatprep.subr.bf16.mxu0 %v1590
    %1899 = vmatpush1.bf16.msra.mxu0 %v1589
    %1900 = vmatprep.subr.bf16.mxu0 %v1594
    %1901 = vmatpush1.bf16.msra.mxu0 %v1593
    %1902 = vmatprep.subr.bf16.mxu0 %v1598
    %1903 = vmatpush1.bf16.msra.mxu0 %v1597
    %1904 = vmatprep.subr.bf16.mxu0 %v1602
    %1905 = vmatpush1.bf16.msra.mxu0 %v1601
    %1906 = vmatprep.subr.bf16.mxu0 %v1606
    %1907 = vmatpush1.bf16.msra.mxu0 %v1605
    %1908 = vmatprep.subr.bf16.mxu0 %v1610
    %1909 = vmatpush1.bf16.msra.mxu0 %v1609
    %1910 = vmatprep.subr.bf16.mxu0 %v1614
    %1911 = vmatpush1.bf16.msra.mxu0 %v1613
    %1912 = vmatprep.subr.bf16.mxu0 %v1618
    %1913 = vmatpush1.bf16.msra.mxu0 %v1617
    %1914 = vmatprep.subr.bf16.mxu0 %v1622
    %1915 = vmatpush1.bf16.msra.mxu0 %v1621
    %1916 = vmatprep.subr.bf16.mxu0 %v1626
    %1917 = vmatpush1.bf16.msra.mxu0 %v1625
    %1918 = vmatprep.subr.bf16.mxu0 %v1630
    %1919 = vmatpush1.bf16.msra.mxu0 %v1629
    %1920 = vmatprep.mubr.bf16.mxu0 %v969
    %1921 = vmatmul.mubr.bf16.gmra.mrb[0].mxu0 %v968
    %v1922 = vpop.f32.mrb[0].mxu0
    %v1923 = vadd.f32 %v1880, %v1922
    %v1924 = vpop.f32.mrb[0].mxu0
    %v1925 = vadd.f32 %v1882, %v1924
    %v1926 = vpop.f32.mrb[0].mxu0
    %v1927 = vadd.f32 %v1884, %v1926
    %v1928 = vpop.f32.mrb[0].mxu0
    %v1929 = vadd.f32 %v1886, %v1928
    %1930 = vdwg.mxu0
    %v1931 = vadd.f32 %v1837, %v1839
    %v1932 = vadd.f32 %v1931, %v1923
    %v1933 = vadd.f32 %v1932, %v1925
    %1934 = vadd.xlane.f32.xlu0 %v1933
    %v1935 = vpop.xlane.xlu0 %1934
    %v1936 = vadd.f32 %v1841, %v1843
    %v1937 = vadd.f32 %v1936, %v1927
    %v1938 = vadd.f32 %v1937, %v1929
    %1939 = vadd.xlane.f32.xlu0 %v1938
    %v1940 = vpop.xlane.xlu0 %1939
    %v1941 = vmul.f32 %v1837, %v1837
    %v1942 = vmul.f32 %v1839, %v1839
    %v1943 = vmul.f32 %v1923, %v1923
    %v1944 = vmul.f32 %v1925, %v1925
    %v1945 = vmul.f32 %v1841, %v1841
    %v1946 = vmul.f32 %v1843, %v1843
    %v1947 = vmul.f32 %v1927, %v1927
    %v1948 = vmul.f32 %v1929, %v1929
    %v1949 = vadd.f32 %v1941, %v1942
    %v1950 = vadd.f32 %v1949, %v1943
    %v1951 = vadd.f32 %v1950, %v1944
    %1952 = vadd.xlane.f32.xlu0 %v1951
    %v1953 = vpop.xlane.xlu0 %1952
    %v1954 = vadd.f32 %v1945, %v1946
    %v1955 = vadd.f32 %v1954, %v1947
    %v1956 = vadd.f32 %v1955, %v1948
    %1957 = vadd.xlane.f32.xlu0 %v1956
    %v1958 = vpop.xlane.xlu0 %1957
    %v1959 = vmul.f32 %v1935, 0.001953125
    %v1960 = vmul.f32 %v1940, 0.001953125
    %v1961 = vmul.f32 %v1953, 0.001953125
    %v1962 = vmul.f32 %v1958, 0.001953125
    %v1963 = vmul.f32 %v1959, %v1959
    %v1964 = vmul.f32 %v1960, %v1960
    %v1965 = vsub.f32 %v1961, %v1963
    %v1966 = vsub.f32 %v1962, %v1964
    %v1967 = vsub.f32 %v1837, %v1959
    %v1968 = vsub.f32 %v1839, %v1959
    %v1969 = vsub.f32 %v1923, %v1959
    %v1970 = vsub.f32 %v1925, %v1959
    %v1971 = vsub.f32 %v1841, %v1960
    %v1972 = vsub.f32 %v1843, %v1960
    %v1973 = vsub.f32 %v1927, %v1960
    %v1974 = vsub.f32 %v1929, %v1960
    %v1975 = vadd.f32 %v1965, 1e-05
    %v1976 = vadd.f32 %v1966, 1e-05
    %v1977 = vrsqrt.pop %v1975
    %v1978 = vrsqrt.pop %v1976
    %v1979 = vmul.f32 %v1967, %v1977
    %v1980 = vmul.f32 %v1968, %v1977
    %v1981 = vmul.f32 %v1969, %v1977
    %v1982 = vmul.f32 %v1970, %v1977
    %v1983 = vmul.f32 %v1971, %v1978
    %v1984 = vmul.f32 %v1972, %v1978
    %v1985 = vmul.f32 %v1973, %v1978
    %v1986 = vmul.f32 %v1974, %v1978
    %v1988 = vlaneseq
    %v1989 = vshrl.u32 %v1988, 7
    %v1990 = vsub.s32 0, %v1989
    %v1991 = vrot.slane %v96, %v1990
    %v1992 = vlaneseq
    %v1993 = vshrl.u32 %v1992, 7
    %v1994 = vsub.s32 1, %v1993
    %v1995 = vrot.slane %v96, %v1994
    %v1996 = vlaneseq
    %v1997 = vshrl.u32 %v1996, 7
    %v1998 = vsub.s32 2, %v1997
    %v1999 = vrot.slane %v96, %v1998
    %v2000 = vlaneseq
    %v2001 = vshrl.u32 %v2000, 7
    %v2002 = vsub.s32 3, %v2001
    %v2003 = vrot.slane %v96, %v2002
    %v2008 = vmul.f32 %v1979, %v1991
    %v2009 = vmul.f32 %v1980, %v1995
    %v2010 = vmul.f32 %v1981, %v1999
    %v2011 = vmul.f32 %v1982, %v2003
    %v2012 = vmul.f32 %v1983, %v1991
    %v2013 = vmul.f32 %v1984, %v1995
    %v2014 = vmul.f32 %v1985, %v1999
    %v2015 = vmul.f32 %v1986, %v2003
    %v2017 = vlaneseq
    %v2018 = vshrl.u32 %v2017, 7
    %v2019 = vsub.s32 0, %v2018
    %v2020 = vrot.slane %v98, %v2019
    %v2021 = vlaneseq
    %v2022 = vshrl.u32 %v2021, 7
    %v2023 = vsub.s32 1, %v2022
    %v2024 = vrot.slane %v98, %v2023
    %v2025 = vlaneseq
    %v2026 = vshrl.u32 %v2025, 7
    %v2027 = vsub.s32 2, %v2026
    %v2028 = vrot.slane %v98, %v2027
    %v2029 = vlaneseq
    %v2030 = vshrl.u32 %v2029, 7
    %v2031 = vsub.s32 3, %v2030
    %v2032 = vrot.slane %v98, %v2031
    %v2037 = vadd.f32 %v2008, %v2020
    %v2038 = vadd.f32 %v2009, %v2024
    %v2039 = vadd.f32 %v2010, %v2028
    %v2040 = vadd.f32 %v2011, %v2032
    %v2041 = vadd.f32 %v2012, %v2020
    %v2042 = vadd.f32 %v2013, %v2024
    %v2043 = vadd.f32 %v2014, %v2028
    %v2044 = vadd.f32 %v2015, %v2032
    %v2045 = vxor.u32 %v2037, 2147483648
    %v2046 = vxor.u32 %v2038, 2147483648
    %v2047 = vxor.u32 %v2039, 2147483648
    %v2048 = vxor.u32 %v2040, 2147483648
    %v2049 = vxor.u32 %v2041, 2147483648
    %v2050 = vxor.u32 %v2042, 2147483648
    %v2051 = vxor.u32 %v2043, 2147483648
    %v2052 = vxor.u32 %v2044, 2147483648
    %v2053 = vmul.f32 %v2045, 1.442695
    %v2054 = vpow.pop %v2053
    %v2055 = vmul.f32 %v2046, 1.442695
    %v2056 = vpow.pop %v2055
    %v2057 = vmul.f32 %v2047, 1.442695
    %v2058 = vpow.pop %v2057
    %v2059 = vmul.f32 %v2048, 1.442695
    %v2060 = vpow.pop %v2059
    %v2061 = vmul.f32 %v2049, 1.442695
    %v2062 = vpow.pop %v2061
    %v2063 = vmul.f32 %v2050, 1.442695
    %v2064 = vpow.pop %v2063
    %v2065 = vmul.f32 %v2051, 1.442695
    %v2066 = vpow.pop %v2065
    %v2067 = vmul.f32 %v2052, 1.442695
    %v2068 = vpow.pop %v2067
    %v2069 = vadd.f32 %v2054, 1.0
    %v2070 = vadd.f32 %v2056, 1.0
    %v2071 = vadd.f32 %v2058, 1.0
    %v2072 = vadd.f32 %v2060, 1.0
    %v2073 = vadd.f32 %v2062, 1.0
    %v2074 = vadd.f32 %v2064, 1.0
    %v2075 = vadd.f32 %v2066, 1.0
    %v2076 = vadd.f32 %v2068, 1.0
    %v2077 = vrcp.pop %v2069
    %v2078 = vmul.f32 1.0, %v2077
    %v2079 = vrcp.pop %v2070
    %v2080 = vmul.f32 1.0, %v2079
    %v2081 = vrcp.pop %v2071
    %v2082 = vmul.f32 1.0, %v2081
    %v2083 = vrcp.pop %v2072
    %v2084 = vmul.f32 1.0, %v2083
    %v2085 = vrcp.pop %v2073
    %v2086 = vmul.f32 1.0, %v2085
    %v2087 = vrcp.pop %v2074
    %v2088 = vmul.f32 1.0, %v2087
    %v2089 = vrcp.pop %v2075
    %v2090 = vmul.f32 1.0, %v2089
    %v2091 = vrcp.pop %v2076
    %v2092 = vmul.f32 1.0, %v2091
    %v2093 = vmul.f32 %v2037, %v2078
    %v2094 = vmul.f32 %v2038, %v2080
    %v2095 = vmul.f32 %v2039, %v2082
    %v2096 = vmul.f32 %v2040, %v2084
    %v2097 = vmul.f32 %v2041, %v2086
    %v2098 = vmul.f32 %v2042, %v2088
    %v2099 = vmul.f32 %v2043, %v2090
    %v2100 = vmul.f32 %v2044, %v2092
    %v2101 = vpack.c.bf16 %v2097, %v2093
    %v2102 = vpack.c.bf16 %v2098, %v2094
    %v2103 = vpack.c.bf16 %v2099, %v2095
    %v2104 = vpack.c.bf16 %v2100, %v2096
    %v2105 = vld [vmem:[#allocation8] sm:$0xf]
    %v2106 = vld [vmem:[#allocation8 + $0x4] sm:$0xf]
    %v2107 = vld [vmem:[#allocation8 + $0x8] sm:$0xf]
    %v2108 = vld [vmem:[#allocation8 + $0xc] sm:$0xf]
    %v2109 = vld [vmem:[#allocation8 + $0x10] sm:$0xf]
    %v2110 = vld [vmem:[#allocation8 + $0x14] sm:$0xf]
    %v2111 = vld [vmem:[#allocation8 + $0x18] sm:$0xf]
    %v2112 = vld [vmem:[#allocation8 + $0x1c] sm:$0xf]
    %v2113 = vld [vmem:[#allocation8 + $0x20] sm:$0xf]
    %v2114 = vld [vmem:[#allocation8 + $0x24] sm:$0xf]
    %v2115 = vld [vmem:[#allocation8 + $0x28] sm:$0xf]
    %v2116 = vld [vmem:[#allocation8 + $0x2c] sm:$0xf]
    %v2117 = vld [vmem:[#allocation8 + $0x30] sm:$0xf]
    %v2118 = vld [vmem:[#allocation8 + $0x34] sm:$0xf]
    %v2119 = vld [vmem:[#allocation8 + $0x38] sm:$0xf]
    %v2120 = vld [vmem:[#allocation8 + $0x3c] sm:$0xf]
    %v2121 = vld [vmem:[#allocation8 + $0x40] sm:$0xf]
    %v2122 = vld [vmem:[#allocation8 + $0x44] sm:$0xf]
    %v2123 = vld [vmem:[#allocation8 + $0x48] sm:$0xf]
    %v2124 = vld [vmem:[#allocation8 + $0x4c] sm:$0xf]
    %v2125 = vld [vmem:[#allocation8 + $0x50] sm:$0xf]
    %v2126 = vld [vmem:[#allocation8 + $0x54] sm:$0xf]
    %v2127 = vld [vmem:[#allocation8 + $0x58] sm:$0xf]
    %v2128 = vld [vmem:[#allocation8 + $0x5c] sm:$0xf]
    %v2129 = vld [vmem:[#allocation8 + $0x60] sm:$0xf]
    %v2130 = vld [vmem:[#allocation8 + $0x64] sm:$0xf]
    %v2131 = vld [vmem:[#allocation8 + $0x68] sm:$0xf]
    %v2132 = vld [vmem:[#allocation8 + $0x6c] sm:$0xf]
    %v2133 = vld [vmem:[#allocation8 + $0x70] sm:$0xf]
    %v2134 = vld [vmem:[#allocation8 + $0x74] sm:$0xf]
    %v2135 = vld [vmem:[#allocation8 + $0x78] sm:$0xf]
    %v2136 = vld [vmem:[#allocation8 + $0x7c] sm:$0xf]
    %v2137 = vld [vmem:[#allocation8 + $0x80] sm:$0xf]
    %v2138 = vld [vmem:[#allocation8 + $0x84] sm:$0xf]
    %v2139 = vld [vmem:[#allocation8 + $0x88] sm:$0xf]
    %v2140 = vld [vmem:[#allocation8 + $0x8c] sm:$0xf]
    %v2141 = vld [vmem:[#allocation8 + $0x90] sm:$0xf]
    %v2142 = vld [vmem:[#allocation8 + $0x94] sm:$0xf]
    %v2143 = vld [vmem:[#allocation8 + $0x98] sm:$0xf]
    %v2144 = vld [vmem:[#allocation8 + $0x9c] sm:$0xf]
    %v2145 = vld [vmem:[#allocation8 + $0xa0] sm:$0xf]
    %v2146 = vld [vmem:[#allocation8 + $0xa4] sm:$0xf]
    %v2147 = vld [vmem:[#allocation8 + $0xa8] sm:$0xf]
    %v2148 = vld [vmem:[#allocation8 + $0xac] sm:$0xf]
    %v2149 = vld [vmem:[#allocation8 + $0xb0] sm:$0xf]
    %v2150 = vld [vmem:[#allocation8 + $0xb4] sm:$0xf]
    %v2151 = vld [vmem:[#allocation8 + $0xb8] sm:$0xf]
    %v2152 = vld [vmem:[#allocation8 + $0xbc] sm:$0xf]
    %v2153 = vld [vmem:[#allocation8 + $0xc0] sm:$0xf]
    %v2154 = vld [vmem:[#allocation8 + $0xc4] sm:$0xf]
    %v2155 = vld [vmem:[#allocation8 + $0xc8] sm:$0xf]
    %v2156 = vld [vmem:[#allocation8 + $0xcc] sm:$0xf]
    %v2157 = vld [vmem:[#allocation8 + $0xd0] sm:$0xf]
    %v2158 = vld [vmem:[#allocation8 + $0xd4] sm:$0xf]
    %v2159 = vld [vmem:[#allocation8 + $0xd8] sm:$0xf]
    %v2160 = vld [vmem:[#allocation8 + $0xdc] sm:$0xf]
    %v2161 = vld [vmem:[#allocation8 + $0xe0] sm:$0xf]
    %v2162 = vld [vmem:[#allocation8 + $0xe4] sm:$0xf]
    %v2163 = vld [vmem:[#allocation8 + $0xe8] sm:$0xf]
    %v2164 = vld [vmem:[#allocation8 + $0xec] sm:$0xf]
    %v2165 = vld [vmem:[#allocation8 + $0xf0] sm:$0xf]
    %v2166 = vld [vmem:[#allocation8 + $0xf4] sm:$0xf]
    %v2167 = vld [vmem:[#allocation8 + $0xf8] sm:$0xf]
    %v2168 = vld [vmem:[#allocation8 + $0xfc] sm:$0xf]
    %v2233 = vunpack.c.l.b16 %v2105
    %v2234 = vunpack.c.l.b16 %v2106
    %v2235 = vunpack.c.l.b16 %v2107
    %v2236 = vunpack.c.l.b16 %v2108
    %v2237 = vunpack.c.l.b16 %v2109
    %v2238 = vunpack.c.l.b16 %v2110
    %v2239 = vunpack.c.l.b16 %v2111
    %v2240 = vunpack.c.l.b16 %v2112
    %v2241 = vunpack.c.l.b16 %v2113
    %v2242 = vunpack.c.l.b16 %v2114
    %v2243 = vunpack.c.l.b16 %v2115
    %v2244 = vunpack.c.l.b16 %v2116
    %v2245 = vunpack.c.l.b16 %v2117
    %v2246 = vunpack.c.l.b16 %v2118
    %v2247 = vunpack.c.l.b16 %v2119
    %v2248 = vunpack.c.l.b16 %v2120
    %v2249 = vunpack.c.l.b16 %v2121
    %v2250 = vunpack.c.l.b16 %v2122
    %v2251 = vunpack.c.l.b16 %v2123
    %v2252 = vunpack.c.l.b16 %v2124
    %v2253 = vunpack.c.l.b16 %v2125
    %v2254 = vunpack.c.l.b16 %v2126
    %v2255 = vunpack.c.l.b16 %v2127
    %v2256 = vunpack.c.l.b16 %v2128
    %v2257 = vunpack.c.l.b16 %v2129
    %v2258 = vunpack.c.l.b16 %v2130
    %v2259 = vunpack.c.l.b16 %v2131
    %v2260 = vunpack.c.l.b16 %v2132
    %v2261 = vunpack.c.l.b16 %v2133
    %v2262 = vunpack.c.l.b16 %v2134
    %v2263 = vunpack.c.l.b16 %v2135
    %v2264 = vunpack.c.l.b16 %v2136
    %v2265 = vunpack.c.l.b16 %v2137
    %v2266 = vunpack.c.l.b16 %v2138
    %v2267 = vunpack.c.l.b16 %v2139
    %v2268 = vunpack.c.l.b16 %v2140
    %v2269 = vunpack.c.l.b16 %v2141
    %v2270 = vunpack.c.l.b16 %v2142
    %v2271 = vunpack.c.l.b16 %v2143
    %v2272 = vunpack.c.l.b16 %v2144
    %v2273 = vunpack.c.l.b16 %v2145
    %v2274 = vunpack.c.l.b16 %v2146
    %v2275 = vunpack.c.l.b16 %v2147
    %v2276 = vunpack.c.l.b16 %v2148
    %v2277 = vunpack.c.l.b16 %v2149
    %v2278 = vunpack.c.l.b16 %v2150
    %v2279 = vunpack.c.l.b16 %v2151
    %v2280 = vunpack.c.l.b16 %v2152
    %v2281 = vunpack.c.l.b16 %v2153
    %v2282 = vunpack.c.l.b16 %v2154
    %v2283 = vunpack.c.l.b16 %v2155
    %v2284 = vunpack.c.l.b16 %v2156
    %v2285 = vunpack.c.l.b16 %v2157
    %v2286 = vunpack.c.l.b16 %v2158
    %v2287 = vunpack.c.l.b16 %v2159
    %v2288 = vunpack.c.l.b16 %v2160
    %v2289 = vunpack.c.l.b16 %v2161
    %v2290 = vunpack.c.l.b16 %v2162
    %v2291 = vunpack.c.l.b16 %v2163
    %v2292 = vunpack.c.l.b16 %v2164
    %v2293 = vunpack.c.l.b16 %v2165
    %v2294 = vunpack.c.l.b16 %v2166
    %v2295 = vunpack.c.l.b16 %v2167
    %v2296 = vunpack.c.l.b16 %v2168
    %v2297 = vpack.c.b16 %v2234, %v2233
    %v2298 = vpack.c.b16 %v2236, %v2235
    %v2299 = vpack.c.b16 %v2238, %v2237
    %v2300 = vpack.c.b16 %v2240, %v2239
    %v2301 = vpack.c.b16 %v2242, %v2241
    %v2302 = vpack.c.b16 %v2244, %v2243
    %v2303 = vpack.c.b16 %v2246, %v2245
    %v2304 = vpack.c.b16 %v2248, %v2247
    %v2305 = vpack.c.b16 %v2250, %v2249
    %v2306 = vpack.c.b16 %v2252, %v2251
    %v2307 = vpack.c.b16 %v2254, %v2253
    %v2308 = vpack.c.b16 %v2256, %v2255
    %v2309 = vpack.c.b16 %v2258, %v2257
    %v2310 = vpack.c.b16 %v2260, %v2259
    %v2311 = vpack.c.b16 %v2262, %v2261
    %v2312 = vpack.c.b16 %v2264, %v2263
    %v2313 = vpack.c.b16 %v2266, %v2265
    %v2314 = vpack.c.b16 %v2268, %v2267
    %v2315 = vpack.c.b16 %v2270, %v2269
    %v2316 = vpack.c.b16 %v2272, %v2271
    %v2317 = vpack.c.b16 %v2274, %v2273
    %v2318 = vpack.c.b16 %v2276, %v2275
    %v2319 = vpack.c.b16 %v2278, %v2277
    %v2320 = vpack.c.b16 %v2280, %v2279
    %v2321 = vpack.c.b16 %v2282, %v2281
    %v2322 = vpack.c.b16 %v2284, %v2283
    %v2323 = vpack.c.b16 %v2286, %v2285
    %v2324 = vpack.c.b16 %v2288, %v2287
    %v2325 = vpack.c.b16 %v2290, %v2289
    %v2326 = vpack.c.b16 %v2292, %v2291
    %v2327 = vpack.c.b16 %v2294, %v2293
    %v2328 = vpack.c.b16 %v2296, %v2295
    %2361 = vmatprep.subr.bf16.mxu0 0
    %2362 = vmatpush1.bf16.msra.mxu0 %v2297
    %2363 = vmatprep.subr.bf16.mxu0 0
    %2364 = vmatpush1.bf16.msra.mxu0 %v2298
    %2365 = vmatprep.subr.bf16.mxu0 0
    %2366 = vmatpush1.bf16.msra.mxu0 %v2299
    %2367 = vmatprep.subr.bf16.mxu0 0
    %2368 = vmatpush1.bf16.msra.mxu0 %v2300
    %2369 = vmatprep.subr.bf16.mxu0 0
    %2370 = vmatpush1.bf16.msra.mxu0 %v2301
    %2371 = vmatprep.subr.bf16.mxu0 0
    %2372 = vmatpush1.bf16.msra.mxu0 %v2302
    %2373 = vmatprep.subr.bf16.mxu0 0
    %2374 = vmatpush1.bf16.msra.mxu0 %v2303
    %2375 = vmatprep.subr.bf16.mxu0 0
    %2376 = vmatpush1.bf16.msra.mxu0 %v2304
    %2377 = vmatprep.subr.bf16.mxu0 0
    %2378 = vmatpush1.bf16.msra.mxu0 %v2305
    %2379 = vmatprep.subr.bf16.mxu0 0
    %2380 = vmatpush1.bf16.msra.mxu0 %v2306
    %2381 = vmatprep.subr.bf16.mxu0 0
    %2382 = vmatpush1.bf16.msra.mxu0 %v2307
    %2383 = vmatprep.subr.bf16.mxu0 0
    %2384 = vmatpush1.bf16.msra.mxu0 %v2308
    %2385 = vmatprep.subr.bf16.mxu0 0
    %2386 = vmatpush1.bf16.msra.mxu0 %v2309
    %2387 = vmatprep.subr.bf16.mxu0 0
    %2388 = vmatpush1.bf16.msra.mxu0 %v2310
    %2389 = vmatprep.subr.bf16.mxu0 0
    %2390 = vmatpush1.bf16.msra.mxu0 %v2311
    %2391 = vmatprep.subr.bf16.mxu0 0
    %2392 = vmatpush1.bf16.msra.mxu0 %v2312
    %2393 = vmatprep.mubr.bf16.mxu0 %v2102
    %2394 = vmatmul.mubr.bf16.gmra.mrb[0].mxu0 %v2101
    %v2395 = vpop.f32.mrb[0].mxu0
    %v2396 = vadd.f32 %v99, %v2395
    %v2397 = vpop.f32.mrb[0].mxu0
    %v2398 = vpop.f32.mrb[0].mxu0
    %v2399 = vadd.f32 %v99, %v2398
    %v2400 = vpop.f32.mrb[0].mxu0
    %2401 = vdwg.mxu0
    %2402 = vmatprep.subr.bf16.mxu0 0
    %2403 = vmatpush1.bf16.msra.mxu0 %v2313
    %2404 = vmatprep.subr.bf16.mxu0 0
    %2405 = vmatpush1.bf16.msra.mxu0 %v2314
    %2406 = vmatprep.subr.bf16.mxu0 0
    %2407 = vmatpush1.bf16.msra.mxu0 %v2315
    %2408 = vmatprep.subr.bf16.mxu0 0
    %2409 = vmatpush1.bf16.msra.mxu0 %v2316
    %2410 = vmatprep.subr.bf16.mxu0 0
    %2411 = vmatpush1.bf16.msra.mxu0 %v2317
    %2412 = vmatprep.subr.bf16.mxu0 0
    %2413 = vmatpush1.bf16.msra.mxu0 %v2318
    %2414 = vmatprep.subr.bf16.mxu0 0
    %2415 = vmatpush1.bf16.msra.mxu0 %v2319
    %2416 = vmatprep.subr.bf16.mxu0 0
    %2417 = vmatpush1.bf16.msra.mxu0 %v2320
    %2418 = vmatprep.subr.bf16.mxu0 0
    %2419 = vmatpush1.bf16.msra.mxu0 %v2321
    %2420 = vmatprep.subr.bf16.mxu0 0
    %2421 = vmatpush1.bf16.msra.mxu0 %v2322
    %2422 = vmatprep.subr.bf16.mxu0 0
    %2423 = vmatpush1.bf16.msra.mxu0 %v2323
    %2424 = vmatprep.subr.bf16.mxu0 0
    %2425 = vmatpush1.bf16.msra.mxu0 %v2324
    %2426 = vmatprep.subr.bf16.mxu0 0
    %2427 = vmatpush1.bf16.msra.mxu0 %v2325
    %2428 = vmatprep.subr.bf16.mxu0 0
    %2429 = vmatpush1.bf16.msra.mxu0 %v2326
    %2430 = vmatprep.subr.bf16.mxu0 0
    %2431 = vmatpush1.bf16.msra.mxu0 %v2327
    %2432 = vmatprep.subr.bf16.mxu0 0
    %2433 = vmatpush1.bf16.msra.mxu0 %v2328
    %2434 = vmatprep.mubr.bf16.mxu0 %v2104
    %2435 = vmatmul.mubr.bf16.gmra.mrb[0].mxu0 %v2103
    %v2436 = vpop.f32.mrb[0].mxu0
    %v2437 = vadd.f32 %v2396, %v2436
    %v2438 = vpop.f32.mrb[0].mxu0
    %v2439 = vpop.f32.mrb[0].mxu0
    %v2440 = vadd.f32 %v2399, %v2439
    %v2441 = vpop.f32.mrb[0].mxu0
    %2442 = vdwg.mxu0
    %2443 = vst [vmem:[#allocation11] sm:$0xff] %v2437
    %2444 = vst [vmem:[#allocation11 + $0x8] sm:$0xff] %v2440
    // Predicated region
    $region42: #{tpu_custom_call.1} parent=1 // pred_check
      _
    $region43: #{tpu_custom_call.1} parent=1 // pred_check_branch
      %2446 = sbr.rel (0) target = $region45
    $region44: #{tpu_custom_call.1} parent=1 // pred_region
      %s2448 = ssub.s32 256, 256
      %2449 = vsyncadd [#allocation4], %s2448
      %s2450 = sshll.u32 [#allocation11], 4
      %s2451 = int_to_ptr.vmem [resolvable:$true] %s2450
      %2456 = dma.vmem_to_hbm [thread:$0]  %s2451, 256, %s5, [#allocation4], 128, 128, 8
    $region45: #{tpu_custom_call.1} parent=1 // pred_fallthru
      _
    // Predicated region
    $region46: #{tpu_custom_call.1} parent=1 // pred_check
      _
    $region47: #{tpu_custom_call.1} parent=1 // pred_check_branch
      %2458 = sbr.rel (0) target = $region49
    $region48: #{tpu_custom_call.1} parent=1 // pred_region
      %2459 = dma.done [#allocation4], 256
    $region49: #{tpu_custom_call.1} parent=1 // pred_fallthru
      _
    %2460 = vsyncpa [#allocation3], 1
    %2461 = vsyncpa [#allocation6], 1
    %2462 = vsyncpa [#allocation9], 1
    %2463 = vsyncpa [#allocation4], 1

</llo_original>
